<compile_context>
chip_gen: v7x
topology: tpu7x:2x2x1
jax: 0.10.0
libtpu: 0.0.40
codegen_flags: <defaults>
</compile_context>

<pallas_src>
import jax
import jax.numpy as jnp
from jax import lax
from jax.experimental import pallas as pl
from jax.experimental.pallas import tpu as pltpu


def _make_lstm_kernel(num_layers, hidden_dim, t_chunk, unroll):
    L, H, TC = num_layers, hidden_dim, t_chunk

    def kernel(*refs):
        # refs = [x_ref, (w_cat_t, bias) * L, out_ref, h_scratch, c_scratch]
        x_ref = refs[0]
        w_refs = refs[1:1 + 2 * L]
        out_ref = refs[1 + 2 * L]
        h_ref = refs[2 + 2 * L]
        c_ref = refs[3 + 2 * L]

        @pl.when(pl.program_id(0) == 0)
        def _():
            h_ref[...] = jnp.zeros_like(h_ref)
            c_ref[...] = jnp.zeros_like(c_ref)

        # Weights are grid-constant: load once per chunk, keep as values.
        ws = [w_refs[2 * l][...] for l in range(L)]        # (D_l + H, 4H)
        bs = [w_refs[2 * l + 1][...] for l in range(L)]    # (1, 4H)

        # Per-layer (h, c) carry: read from scratch once, run through the chunk
        # as loop-carried values, write back once at the end of the chunk.
        h0 = tuple(h_ref[l] for l in range(L))
        c0 = tuple(c_ref[l] for l in range(L))

        def step(s, carry):
            hs, cs = carry
            inp = x_ref[s]                                 # (B, D_in)
            new_h, new_c = [], []
            for l in range(L):
                # Fused gate matmul: [x, h] @ [W_ih ; W_hh]^T  (one MXU op).
                xin = jnp.concatenate([inp, hs[l]], axis=-1)        # (B, D_l + H)
                gates = (
                    jnp.dot(xin, ws[l], preferred_element_type=jnp.float32)
                    + bs[l]
                )                                                   # (B, 4H) order i,f,o,g
                sig = jax.nn.sigmoid(gates[:, :3 * H])              # dense 3H slab
                i_g = sig[:, 0 * H:1 * H]
                f_g = sig[:, 1 * H:2 * H]
                o_g = sig[:, 2 * H:3 * H]
                g_g = jnp.tanh(gates[:, 3 * H:])                    # dense H slab
                c_n = f_g * cs[l] + i_g * g_g
                h_n = o_g * jnp.tanh(c_n)
                new_h.append(h_n)
                new_c.append(c_n)
                inp = h_n
            out_ref[s] = inp                               # top-layer hidden state
            return tuple(new_h), tuple(new_c)

        hf, cf = lax.fori_loop(0, TC, step, (h0, c0), unroll=unroll)

        for l in range(L):
            h_ref[l] = hf[l]
            c_ref[l] = cf[l]

    return kernel


def screwing_model_seq_pallas(x, params, *, hidden_dim, num_layers, t_chunk=32):
    """x: (B, T, input_dim) batch_first (PyTorch convention). Returns (B, T, output_dim)."""
    x = x.astype(jnp.float32)
    B, T, D = x.shape
    layers, (w_out, b_out) = params
    H, L = hidden_dim, num_layers

    TC = max(1, min(t_chunk, T))
    n_chunks = -(-T // TC)
    T_pad = n_chunks * TC
    B_pad = -(-B // 8) * 8          # pad batch to f32 sublane multiple

    # Time-major, zero-padded input for the kernel: (T_pad, B_pad, D).
    x_tm = jnp.transpose(x, (1, 0, 2))
    x_tm = jnp.pad(x_tm, ((0, T_pad - T), (0, B_pad - B), (0, 0)))

    # Gate reorder (i, f, g, o) -> (i, f, o, g): one sigmoid slab | one tanh slab.
    perm = jnp.concatenate(
        [jnp.arange(0, 2 * H), jnp.arange(3 * H, 4 * H), jnp.arange(2 * H, 3 * H)]
    )

    flat_inputs = []
    in_specs = [pl.BlockSpec((TC, B_pad, D), lambda c: (c, 0, 0))]
    for (w_ih, w_hh, b_ih, b_hh) in layers:
        w_cat = jnp.concatenate([w_ih, w_hh], axis=1)[perm]        # (4H, D_l + H)
        w_cat_t = jnp.transpose(w_cat).astype(jnp.float32)         # (D_l + H, 4H)
        bias = (b_ih + b_hh)[perm].astype(jnp.float32)[None, :]    # (1, 4H)
        flat_inputs += [w_cat_t, bias]
        in_specs += [
            pl.BlockSpec(w_cat_t.shape, lambda c: (0, 0)),
            pl.BlockSpec(bias.shape, lambda c: (0, 0)),
        ]

    unroll = min(TC, 8)

    h_all = pl.pallas_call(
        _make_lstm_kernel(L, H, TC, unroll),
        out_shape=jax.ShapeDtypeStruct((T_pad, B_pad, H), jnp.float32),
        grid_spec=pltpu.PrefetchScalarGridSpec(
            num_scalar_prefetch=0,
            grid=(n_chunks,),
            in_specs=in_specs,
            out_specs=pl.BlockSpec((TC, B_pad, H), lambda c: (c, 0, 0)),
            scratch_shapes=[
                pltpu.VMEM((L, B_pad, H), jnp.float32),   # hidden state per layer
                pltpu.VMEM((L, B_pad, H), jnp.float32),   # cell state per layer
            ],
        ),
        compiler_params=pltpu.CompilerParams(
            # Time recurrence: must stay sequential (never mark "parallel").
            dimension_semantics=("arbitrary",),
        ),
    )(x_tm, *flat_inputs)

    # Un-pad, back to batch-first, then the Linear head as one XLA matmul.
    h_bt = jnp.transpose(h_all[:T, :B, :], (1, 0, 2))              # (B, T, H)
    return h_bt @ jnp.transpose(w_out).astype(jnp.float32) + b_out.astype(jnp.float32)


def init_params(key, input_dim, hidden_dim, num_layers, output_dim):
    """Deterministic init mirroring PyTorch LSTM/Linear shapes (uniform(-1/sqrt(H), 1/sqrt(H)))."""
    k = 1.0 / jnp.sqrt(jnp.float32(hidden_dim))
    layers = []
    for l in range(num_layers):
        d_in = input_dim if l == 0 else hidden_dim
        key, k1, k2, k3, k4 = jax.random.split(key, 5)
        w_ih = jax.random.uniform(k1, (4 * hidden_dim, d_in), jnp.float32, -k, k)
        w_hh = jax.random.uniform(k2, (4 * hidden_dim, hidden_dim), jnp.float32, -k, k)
        b_ih = jax.random.uniform(k3, (4 * hidden_dim,), jnp.float32, -k, k)
        b_hh = jax.random.uniform(k4, (4 * hidden_dim,), jnp.float32, -k, k)
        layers.append((w_ih, w_hh, b_ih, b_hh))
    key, k5, k6 = jax.random.split(key, 3)
    ko = 1.0 / jnp.sqrt(jnp.float32(hidden_dim))
    w_out = jax.random.uniform(k5, (output_dim, hidden_dim), jnp.float32, -ko, ko)
    b_out = jax.random.uniform(k6, (output_dim,), jnp.float32, -ko, ko)
    return layers, (w_out, b_out)


def screwing_model_seq_ref(x, params, *, hidden_dim):
    """Pure-JAX reference (lax.scan) with PyTorch LSTM semantics, for verification."""
    x = x.astype(jnp.float32)
    B, T, _ = x.shape
    H = hidden_dim
    layers, (w_out, b_out) = params
    seq = x
    for (w_ih, w_hh, b_ih, b_hh) in layers:
        def step(carry, xt, w_ih=w_ih, w_hh=w_hh, b_ih=b_ih, b_hh=b_hh):
            hp, cp = carry
            gates = xt @ w_ih.T + hp @ w_hh.T + b_ih + b_hh
            i_g = jax.nn.sigmoid(gates[:, 0 * H:1 * H])
            f_g = jax.nn.sigmoid(gates[:, 1 * H:2 * H])
            g_g = jnp.tanh(gates[:, 2 * H:3 * H])
            o_g = jax.nn.sigmoid(gates[:, 3 * H:4 * H])
            c = f_g * cp + i_g * g_g
            h = o_g * jnp.tanh(c)
            return (h, c), h
        init = (jnp.zeros((B, H), jnp.float32), jnp.zeros((B, H), jnp.float32))
        _, outs = lax.scan(step, init, jnp.transpose(seq, (1, 0, 2)))
        seq = jnp.transpose(outs, (1, 0, 2))
    return seq @ w_out.T + b_out


if __name__ == "__main__":
    # Small shapes consistent with the module's forward: (batch, seq, input_dim).
    B, T = 2, 8
    input_dim, hidden_dim, num_layers, output_dim = 6, 32, 2, 4

    key = jax.random.PRNGKey(0)
    key, kx = jax.random.split(key)
    x = jax.random.normal(kx, (B, T, input_dim), jnp.float32)

    params = init_params(key, input_dim, hidden_dim, num_layers, output_dim)

    out = screwing_model_seq_pallas(x, params, hidden_dim=hidden_dim, num_layers=num_layers)
    out = jax.block_until_ready(out)

    ref = screwing_model_seq_ref(x, params, hidden_dim=hidden_dim)
    assert out.shape == (B, T, output_dim)
    err = float(jnp.max(jnp.abs(out - ref)))
    assert jnp.allclose(out, ref, atol=1e-5, rtol=1e-5), err

    print("KERNEL_OK")
</pallas_src>

<mosaic_0001>
module attributes {stable_mosaic.version = 11 : i64} {
  func.func @kernel(%arg0: i32, %arg1: memref<8x8x6xf32, #tpu.memory_space<vmem>>, %arg2: memref<38x128xf32, #tpu.memory_space<vmem>>, %arg3: memref<1x128xf32, #tpu.memory_space<vmem>>, %arg4: memref<64x128xf32, #tpu.memory_space<vmem>>, %arg5: memref<1x128xf32, #tpu.memory_space<vmem>>, %arg6: memref<8x8x32xf32, #tpu.memory_space<vmem>>, %arg7: memref<2x8x32xf32, #tpu.memory_space<vmem>>, %arg8: memref<2x8x32xf32, #tpu.memory_space<vmem>>) attributes {dimension_semantics = [#tpu.dimension_semantics<arbitrary>], iteration_bounds = array<i64: 1>, scalar_prefetch = 0 : i64, scratch_operands = 2 : i64, tpu.core_type = #tpu.core_type<tc>, window_params = [{transform_indices = @transform_0, window_bounds = array<i64: 8, 8, 6>}, {pipeline_mode = #tpu.pipeline_mode<synchronous>, transform_indices = @transform_1, window_bounds = array<i64: 38, 128>}, {pipeline_mode = #tpu.pipeline_mode<synchronous>, transform_indices = @transform_2, window_bounds = array<i64: 1, 128>}, {pipeline_mode = #tpu.pipeline_mode<synchronous>, transform_indices = @transform_3, window_bounds = array<i64: 64, 128>}, {pipeline_mode = #tpu.pipeline_mode<synchronous>, transform_indices = @transform_4, window_bounds = array<i64: 1, 128>}, {transform_indices = @transform_5, window_bounds = array<i64: 8, 8, 32>}]} {
    %c0_i32 = arith.constant 0 : i32
    %0 = arith.cmpi eq, %arg0, %c0_i32 : i32
    %1 = arith.extui %0 : i1 to i32
    %c0_i32_0 = arith.constant 0 : i32
    %2 = arith.cmpi ne, %1, %c0_i32_0 : i32
    scf.if %2 {
      %cst_95 = arith.constant 0.000000e+00 : f32
      %403 = vector.broadcast %cst_95 : f32 to vector<2x8x32xf32>
      %c0_96 = arith.constant 0 : index
      %c0_97 = arith.constant 0 : index
      %c0_98 = arith.constant 0 : index
      %404 = vector.load %arg7[%c0_96, %c0_97, %c0_98] : memref<2x8x32xf32, #tpu.memory_space<vmem>>, vector<2x8x32xf32>
      tpu.vector_store %arg7[%c0_96, %c0_97, %c0_98], %403 {strides = array<i32>} : memref<2x8x32xf32, #tpu.memory_space<vmem>>, vector<2x8x32xf32>,
      %cst_99 = arith.constant 0.000000e+00 : f32
      %405 = vector.broadcast %cst_99 : f32 to vector<2x8x32xf32>
      %c0_100 = arith.constant 0 : index
      %c0_101 = arith.constant 0 : index
      %c0_102 = arith.constant 0 : index
      %406 = vector.load %arg8[%c0_100, %c0_101, %c0_102] : memref<2x8x32xf32, #tpu.memory_space<vmem>>, vector<2x8x32xf32>
      tpu.vector_store %arg8[%c0_100, %c0_101, %c0_102], %405 {strides = array<i32>} : memref<2x8x32xf32, #tpu.memory_space<vmem>>, vector<2x8x32xf32>,
    } else {
    }
    %c0 = arith.constant 0 : index
    %c0_1 = arith.constant 0 : index
    %3 = vector.load %arg2[%c0, %c0_1] : memref<38x128xf32, #tpu.memory_space<vmem>>, vector<38x128xf32>
    %c0_2 = arith.constant 0 : index
    %c0_3 = arith.constant 0 : index
    %4 = vector.load %arg4[%c0_2, %c0_3] : memref<64x128xf32, #tpu.memory_space<vmem>>, vector<64x128xf32>
    %c0_4 = arith.constant 0 : index
    %c0_5 = arith.constant 0 : index
    %5 = vector.load %arg3[%c0_4, %c0_5] : memref<1x128xf32, #tpu.memory_space<vmem>>, vector<1x128xf32>
    %c0_6 = arith.constant 0 : index
    %c0_7 = arith.constant 0 : index
    %6 = vector.load %arg5[%c0_6, %c0_7] : memref<1x128xf32, #tpu.memory_space<vmem>>, vector<1x128xf32>
    %c0_8 = arith.constant 0 : index
    %c0_9 = arith.constant 0 : index
    %c0_10 = arith.constant 0 : index
    %7 = vector.load %arg7[%c0_8, %c0_9, %c0_10] : memref<2x8x32xf32, #tpu.memory_space<vmem>>, vector<1x8x32xf32>
    %8 = vector.shape_cast %7 : vector<1x8x32xf32> to vector<8x32xf32>
    %c1 = arith.constant 1 : index
    %c0_11 = arith.constant 0 : index
    %c0_12 = arith.constant 0 : index
    %9 = vector.load %arg7[%c1, %c0_11, %c0_12] : memref<2x8x32xf32, #tpu.memory_space<vmem>>, vector<1x8x32xf32>
    %10 = vector.shape_cast %9 : vector<1x8x32xf32> to vector<8x32xf32>
    %c0_13 = arith.constant 0 : index
    %c0_14 = arith.constant 0 : index
    %c0_15 = arith.constant 0 : index
    %11 = vector.load %arg8[%c0_13, %c0_14, %c0_15] : memref<2x8x32xf32, #tpu.memory_space<vmem>>, vector<1x8x32xf32>
    %12 = vector.shape_cast %11 : vector<1x8x32xf32> to vector<8x32xf32>
    %c1_16 = arith.constant 1 : index
    %c0_17 = arith.constant 0 : index
    %c0_18 = arith.constant 0 : index
    %13 = vector.load %arg8[%c1_16, %c0_17, %c0_18] : memref<2x8x32xf32, #tpu.memory_space<vmem>>, vector<1x8x32xf32>
    %14 = vector.shape_cast %13 : vector<1x8x32xf32> to vector<8x32xf32>
    %c0_i32_19 = arith.constant 0 : i32
    %15 = arith.index_cast %c0_i32_19 : i32 to index
    %c0_20 = arith.constant 0 : index
    %c0_21 = arith.constant 0 : index
    %16 = vector.load %arg1[%15, %c0_20, %c0_21] : memref<8x8x6xf32, #tpu.memory_space<vmem>>, vector<1x8x6xf32>
    %17 = vector.shape_cast %16 : vector<1x8x6xf32> to vector<8x6xf32>
    %18 = tpu.concatenate %17, %8 in 1 : vector<8x6xf32>, vector<8x32xf32> -> vector<8x38xf32>
    %cst = arith.constant dense<0.000000e+00> : vector<8x128xf32>
    %19 = tpu.matmul %18, %3, %cst {dimension_numbers = #tpu.dot_dimension_numbers<[1], [0], [0], [1], [0, 0, 1, 1], [], []>} : vector<8x38xf32>, vector<38x128xf32>, vector<8x128xf32> -> vector<8x128xf32>
    %20 = vector.broadcast %5 : vector<1x128xf32> to vector<8x128xf32>
    %21 = arith.addf %19, %20 : vector<8x128xf32>
    %22 = vector.extract_strided_slice %21 {offsets = [0, 0], sizes = [8, 96], strides = [1, 1]} : vector<8x128xf32> to vector<8x96xf32>
    %23 = arith.negf %22 : vector<8x96xf32>
    %24 = math.exp %23 : vector<8x96xf32>
    %cst_22 = arith.constant 1.000000e+00 : f32
    %25 = vector.broadcast %cst_22 : f32 to vector<8x96xf32>
    %26 = arith.addf %25, %24 : vector<8x96xf32>
    %27 = arith.divf %25, %26 : vector<8x96xf32>
    %28 = vector.extract_strided_slice %27 {offsets = [0, 0], sizes = [8, 32], strides = [1, 1]} : vector<8x96xf32> to vector<8x32xf32>
    %29 = vector.extract_strided_slice %27 {offsets = [0, 32], sizes = [8, 32], strides = [1, 1]} : vector<8x96xf32> to vector<8x32xf32>
    %30 = vector.extract_strided_slice %27 {offsets = [0, 64], sizes = [8, 32], strides = [1, 1]} : vector<8x96xf32> to vector<8x32xf32>
    %31 = vector.extract_strided_slice %21 {offsets = [0, 96], sizes = [8, 32], strides = [1, 1]} : vector<8x128xf32> to vector<8x32xf32>
    %32 = math.tanh %31 : vector<8x32xf32>
    %33 = arith.mulf %29, %12 : vector<8x32xf32>
    %34 = arith.mulf %28, %32 : vector<8x32xf32>
    %35 = arith.addf %33, %34 : vector<8x32xf32>
    %36 = math.tanh %35 : vector<8x32xf32>
    %37 = arith.mulf %30, %36 : vector<8x32xf32>
    %38 = tpu.concatenate %37, %10 in 1 : vector<8x32xf32>, vector<8x32xf32> -> vector<8x64xf32>
    %cst_23 = arith.constant dense<0.000000e+00> : vector<8x128xf32>
    %39 = tpu.matmul %38, %4, %cst_23 {dimension_numbers = #tpu.dot_dimension_numbers<[1], [0], [0], [1], [0, 0, 1, 1], [], []>} : vector<8x64xf32>, vector<64x128xf32>, vector<8x128xf32> -> vector<8x128xf32>
    %40 = vector.broadcast %6 : vector<1x128xf32> to vector<8x128xf32>
    %41 = arith.addf %39, %40 : vector<8x128xf32>
    %42 = vector.extract_strided_slice %41 {offsets = [0, 0], sizes = [8, 96], strides = [1, 1]} : vector<8x128xf32> to vector<8x96xf32>
    %43 = arith.negf %42 : vector<8x96xf32>
    %44 = math.exp %43 : vector<8x96xf32>
    %cst_24 = arith.constant 1.000000e+00 : f32
    %45 = vector.broadcast %cst_24 : f32 to vector<8x96xf32>
    %46 = arith.addf %45, %44 : vector<8x96xf32>
    %47 = arith.divf %45, %46 : vector<8x96xf32>
    %48 = vector.extract_strided_slice %47 {offsets = [0, 0], sizes = [8, 32], strides = [1, 1]} : vector<8x96xf32> to vector<8x32xf32>
    %49 = vector.extract_strided_slice %47 {offsets = [0, 32], sizes = [8, 32], strides = [1, 1]} : vector<8x96xf32> to vector<8x32xf32>
    %50 = vector.extract_strided_slice %47 {offsets = [0, 64], sizes = [8, 32], strides = [1, 1]} : vector<8x96xf32> to vector<8x32xf32>
    %51 = vector.extract_strided_slice %41 {offsets = [0, 96], sizes = [8, 32], strides = [1, 1]} : vector<8x128xf32> to vector<8x32xf32>
    %52 = math.tanh %51 : vector<8x32xf32>
    %53 = arith.mulf %49, %14 : vector<8x32xf32>
    %54 = arith.mulf %48, %52 : vector<8x32xf32>
    %55 = arith.addf %53, %54 : vector<8x32xf32>
    %56 = math.tanh %55 : vector<8x32xf32>
    %57 = arith.mulf %50, %56 : vector<8x32xf32>
    %58 = arith.index_cast %c0_i32_19 : i32 to index
    %c0_25 = arith.constant 0 : index
    %c0_26 = arith.constant 0 : index
    %59 = vector.load %arg6[%58, %c0_25, %c0_26] : memref<8x8x32xf32, #tpu.memory_space<vmem>>, vector<1x8x32xf32>
    %60 = vector.shape_cast %59 : vector<1x8x32xf32> to vector<8x32xf32>
    %61 = vector.shape_cast %57 : vector<8x32xf32> to vector<1x8x32xf32>
    tpu.vector_store %arg6[%58, %c0_25, %c0_26], %61 {strides = array<i32>} : memref<8x8x32xf32, #tpu.memory_space<vmem>>, vector<1x8x32xf32>,
    %c1_i32 = arith.constant 1 : i32
    %62 = arith.index_cast %c1_i32 : i32 to index
    %c0_27 = arith.constant 0 : index
    %c0_28 = arith.constant 0 : index
    %63 = vector.load %arg1[%62, %c0_27, %c0_28] : memref<8x8x6xf32, #tpu.memory_space<vmem>>, vector<1x8x6xf32>
    %64 = vector.shape_cast %63 : vector<1x8x6xf32> to vector<8x6xf32>
    %65 = tpu.concatenate %64, %37 in 1 : vector<8x6xf32>, vector<8x32xf32> -> vector<8x38xf32>
    %cst_29 = arith.constant dense<0.000000e+00> : vector<8x128xf32>
    %66 = tpu.matmul %65, %3, %cst_29 {dimension_numbers = #tpu.dot_dimension_numbers<[1], [0], [0], [1], [0, 0, 1, 1], [], []>} : vector<8x38xf32>, vector<38x128xf32>, vector<8x128xf32> -> vector<8x128xf32>
    %67 = vector.broadcast %5 : vector<1x128xf32> to vector<8x128xf32>
    %68 = arith.addf %66, %67 : vector<8x128xf32>
    %69 = vector.extract_strided_slice %68 {offsets = [0, 0], sizes = [8, 96], strides = [1, 1]} : vector<8x128xf32> to vector<8x96xf32>
    %70 = arith.negf %69 : vector<8x96xf32>
    %71 = math.exp %70 : vector<8x96xf32>
    %cst_30 = arith.constant 1.000000e+00 : f32
    %72 = vector.broadcast %cst_30 : f32 to vector<8x96xf32>
    %73 = arith.addf %72, %71 : vector<8x96xf32>
    %74 = arith.divf %72, %73 : vector<8x96xf32>
    %75 = vector.extract_strided_slice %74 {offsets = [0, 0], sizes = [8, 32], strides = [1, 1]} : vector<8x96xf32> to vector<8x32xf32>
    %76 = vector.extract_strided_slice %74 {offsets = [0, 32], sizes = [8, 32], strides = [1, 1]} : vector<8x96xf32> to vector<8x32xf32>
    %77 = vector.extract_strided_slice %74 {offsets = [0, 64], sizes = [8, 32], strides = [1, 1]} : vector<8x96xf32> to vector<8x32xf32>
    %78 = vector.extract_strided_slice %68 {offsets = [0, 96], sizes = [8, 32], strides = [1, 1]} : vector<8x128xf32> to vector<8x32xf32>
    %79 = math.tanh %78 : vector<8x32xf32>
    %80 = arith.mulf %76, %35 : vector<8x32xf32>
    %81 = arith.mulf %75, %79 : vector<8x32xf32>
    %82 = arith.addf %80, %81 : vector<8x32xf32>
    %83 = math.tanh %82 : vector<8x32xf32>
    %84 = arith.mulf %77, %83 : vector<8x32xf32>
    %85 = tpu.concatenate %84, %57 in 1 : vector<8x32xf32>, vector<8x32xf32> -> vector<8x64xf32>
    %cst_31 = arith.constant dense<0.000000e+00> : vector<8x128xf32>
    %86 = tpu.matmul %85, %4, %cst_31 {dimension_numbers = #tpu.dot_dimension_numbers<[1], [0], [0], [1], [0, 0, 1, 1], [], []>} : vector<8x64xf32>, vector<64x128xf32>, vector<8x128xf32> -> vector<8x128xf32>
    %87 = vector.broadcast %6 : vector<1x128xf32> to vector<8x128xf32>
    %88 = arith.addf %86, %87 : vector<8x128xf32>
    %89 = vector.extract_strided_slice %88 {offsets = [0, 0], sizes = [8, 96], strides = [1, 1]} : vector<8x128xf32> to vector<8x96xf32>
    %90 = arith.negf %89 : vector<8x96xf32>
    %91 = math.exp %90 : vector<8x96xf32>
    %cst_32 = arith.constant 1.000000e+00 : f32
    %92 = vector.broadcast %cst_32 : f32 to vector<8x96xf32>
    %93 = arith.addf %92, %91 : vector<8x96xf32>
    %94 = arith.divf %92, %93 : vector<8x96xf32>
    %95 = vector.extract_strided_slice %94 {offsets = [0, 0], sizes = [8, 32], strides = [1, 1]} : vector<8x96xf32> to vector<8x32xf32>
    %96 = vector.extract_strided_slice %94 {offsets = [0, 32], sizes = [8, 32], strides = [1, 1]} : vector<8x96xf32> to vector<8x32xf32>
    %97 = vector.extract_strided_slice %94 {offsets = [0, 64], sizes = [8, 32], strides = [1, 1]} : vector<8x96xf32> to vector<8x32xf32>
    %98 = vector.extract_strided_slice %88 {offsets = [0, 96], sizes = [8, 32], strides = [1, 1]} : vector<8x128xf32> to vector<8x32xf32>
    %99 = math.tanh %98 : vector<8x32xf32>
    %100 = arith.mulf %96, %55 : vector<8x32xf32>
    %101 = arith.mulf %95, %99 : vector<8x32xf32>
    %102 = arith.addf %100, %101 : vector<8x32xf32>
    %103 = math.tanh %102 : vector<8x32xf32>
    %104 = arith.mulf %97, %103 : vector<8x32xf32>
    %105 = arith.index_cast %c1_i32 : i32 to index
    %c0_33 = arith.constant 0 : index
    %c0_34 = arith.constant 0 : index
    %106 = vector.load %arg6[%105, %c0_33, %c0_34] : memref<8x8x32xf32, #tpu.memory_space<vmem>>, vector<1x8x32xf32>
    %107 = vector.shape_cast %106 : vector<1x8x32xf32> to vector<8x32xf32>
    %108 = vector.shape_cast %104 : vector<8x32xf32> to vector<1x8x32xf32>
    tpu.vector_store %arg6[%105, %c0_33, %c0_34], %108 {strides = array<i32>} : memref<8x8x32xf32, #tpu.memory_space<vmem>>, vector<1x8x32xf32>,
    %c2_i32 = arith.constant 2 : i32
    %109 = arith.index_cast %c2_i32 : i32 to index
    %c0_35 = arith.constant 0 : index
    %c0_36 = arith.constant 0 : index
    %110 = vector.load %arg1[%109, %c0_35, %c0_36] : memref<8x8x6xf32, #tpu.memory_space<vmem>>, vector<1x8x6xf32>
    %111 = vector.shape_cast %110 : vector<1x8x6xf32> to vector<8x6xf32>
    %112 = tpu.concatenate %111, %84 in 1 : vector<8x6xf32>, vector<8x32xf32> -> vector<8x38xf32>
    %cst_37 = arith.constant dense<0.000000e+00> : vector<8x128xf32>
    %113 = tpu.matmul %112, %3, %cst_37 {dimension_numbers = #tpu.dot_dimension_numbers<[1], [0], [0], [1], [0, 0, 1, 1], [], []>} : vector<8x38xf32>, vector<38x128xf32>, vector<8x128xf32> -> vector<8x128xf32>
    %114 = vector.broadcast %5 : vector<1x128xf32> to vector<8x128xf32>
    %115 = arith.addf %113, %114 : vector<8x128xf32>
    %116 = vector.extract_strided_slice %115 {offsets = [0, 0], sizes = [8, 96], strides = [1, 1]} : vector<8x128xf32> to vector<8x96xf32>
    %117 = arith.negf %116 : vector<8x96xf32>
    %118 = math.exp %117 : vector<8x96xf32>
    %cst_38 = arith.constant 1.000000e+00 : f32
    %119 = vector.broadcast %cst_38 : f32 to vector<8x96xf32>
    %120 = arith.addf %119, %118 : vector<8x96xf32>
    %121 = arith.divf %119, %120 : vector<8x96xf32>
    %122 = vector.extract_strided_slice %121 {offsets = [0, 0], sizes = [8, 32], strides = [1, 1]} : vector<8x96xf32> to vector<8x32xf32>
    %123 = vector.extract_strided_slice %121 {offsets = [0, 32], sizes = [8, 32], strides = [1, 1]} : vector<8x96xf32> to vector<8x32xf32>
    %124 = vector.extract_strided_slice %121 {offsets = [0, 64], sizes = [8, 32], strides = [1, 1]} : vector<8x96xf32> to vector<8x32xf32>
    %125 = vector.extract_strided_slice %115 {offsets = [0, 96], sizes = [8, 32], strides = [1, 1]} : vector<8x128xf32> to vector<8x32xf32>
    %126 = math.tanh %125 : vector<8x32xf32>
    %127 = arith.mulf %123, %82 : vector<8x32xf32>
    %128 = arith.mulf %122, %126 : vector<8x32xf32>
    %129 = arith.addf %127, %128 : vector<8x32xf32>
    %130 = math.tanh %129 : vector<8x32xf32>
    %131 = arith.mulf %124, %130 : vector<8x32xf32>
    %132 = tpu.concatenate %131, %104 in 1 : vector<8x32xf32>, vector<8x32xf32> -> vector<8x64xf32>
    %cst_39 = arith.constant dense<0.000000e+00> : vector<8x128xf32>
    %133 = tpu.matmul %132, %4, %cst_39 {dimension_numbers = #tpu.dot_dimension_numbers<[1], [0], [0], [1], [0, 0, 1, 1], [], []>} : vector<8x64xf32>, vector<64x128xf32>, vector<8x128xf32> -> vector<8x128xf32>
    %134 = vector.broadcast %6 : vector<1x128xf32> to vector<8x128xf32>
    %135 = arith.addf %133, %134 : vector<8x128xf32>
    %136 = vector.extract_strided_slice %135 {offsets = [0, 0], sizes = [8, 96], strides = [1, 1]} : vector<8x128xf32> to vector<8x96xf32>
    %137 = arith.negf %136 : vector<8x96xf32>
    %138 = math.exp %137 : vector<8x96xf32>
    %cst_40 = arith.constant 1.000000e+00 : f32
    %139 = vector.broadcast %cst_40 : f32 to vector<8x96xf32>
    %140 = arith.addf %139, %138 : vector<8x96xf32>
    %141 = arith.divf %139, %140 : vector<8x96xf32>
    %142 = vector.extract_strided_slice %141 {offsets = [0, 0], sizes = [8, 32], strides = [1, 1]} : vector<8x96xf32> to vector<8x32xf32>
    %143 = vector.extract_strided_slice %141 {offsets = [0, 32], sizes = [8, 32], strides = [1, 1]} : vector<8x96xf32> to vector<8x32xf32>
    %144 = vector.extract_strided_slice %141 {offsets = [0, 64], sizes = [8, 32], strides = [1, 1]} : vector<8x96xf32> to vector<8x32xf32>
    %145 = vector.extract_strided_slice %135 {offsets = [0, 96], sizes = [8, 32], strides = [1, 1]} : vector<8x128xf32> to vector<8x32xf32>
    %146 = math.tanh %145 : vector<8x32xf32>
    %147 = arith.mulf %143, %102 : vector<8x32xf32>
    %148 = arith.mulf %142, %146 : vector<8x32xf32>
    %149 = arith.addf %147, %148 : vector<8x32xf32>
    %150 = math.tanh %149 : vector<8x32xf32>
    %151 = arith.mulf %144, %150 : vector<8x32xf32>
    %152 = arith.index_cast %c2_i32 : i32 to index
    %c0_41 = arith.constant 0 : index
    %c0_42 = arith.constant 0 : index
    %153 = vector.load %arg6[%152, %c0_41, %c0_42] : memref<8x8x32xf32, #tpu.memory_space<vmem>>, vector<1x8x32xf32>
    %154 = vector.shape_cast %153 : vector<1x8x32xf32> to vector<8x32xf32>
    %155 = vector.shape_cast %151 : vector<8x32xf32> to vector<1x8x32xf32>
    tpu.vector_store %arg6[%152, %c0_41, %c0_42], %155 {strides = array<i32>} : memref<8x8x32xf32, #tpu.memory_space<vmem>>, vector<1x8x32xf32>,
    %c3_i32 = arith.constant 3 : i32
    %156 = arith.index_cast %c3_i32 : i32 to index
    %c0_43 = arith.constant 0 : index
    %c0_44 = arith.constant 0 : index
    %157 = vector.load %arg1[%156, %c0_43, %c0_44] : memref<8x8x6xf32, #tpu.memory_space<vmem>>, vector<1x8x6xf32>
    %158 = vector.shape_cast %157 : vector<1x8x6xf32> to vector<8x6xf32>
    %159 = tpu.concatenate %158, %131 in 1 : vector<8x6xf32>, vector<8x32xf32> -> vector<8x38xf32>
    %cst_45 = arith.constant dense<0.000000e+00> : vector<8x128xf32>
    %160 = tpu.matmul %159, %3, %cst_45 {dimension_numbers = #tpu.dot_dimension_numbers<[1], [0], [0], [1], [0, 0, 1, 1], [], []>} : vector<8x38xf32>, vector<38x128xf32>, vector<8x128xf32> -> vector<8x128xf32>
    %161 = vector.broadcast %5 : vector<1x128xf32> to vector<8x128xf32>
    %162 = arith.addf %160, %161 : vector<8x128xf32>
    %163 = vector.extract_strided_slice %162 {offsets = [0, 0], sizes = [8, 96], strides = [1, 1]} : vector<8x128xf32> to vector<8x96xf32>
    %164 = arith.negf %163 : vector<8x96xf32>
    %165 = math.exp %164 : vector<8x96xf32>
    %cst_46 = arith.constant 1.000000e+00 : f32
    %166 = vector.broadcast %cst_46 : f32 to vector<8x96xf32>
    %167 = arith.addf %166, %165 : vector<8x96xf32>
    %168 = arith.divf %166, %167 : vector<8x96xf32>
    %169 = vector.extract_strided_slice %168 {offsets = [0, 0], sizes = [8, 32], strides = [1, 1]} : vector<8x96xf32> to vector<8x32xf32>
    %170 = vector.extract_strided_slice %168 {offsets = [0, 32], sizes = [8, 32], strides = [1, 1]} : vector<8x96xf32> to vector<8x32xf32>
    %171 = vector.extract_strided_slice %168 {offsets = [0, 64], sizes = [8, 32], strides = [1, 1]} : vector<8x96xf32> to vector<8x32xf32>
    %172 = vector.extract_strided_slice %162 {offsets = [0, 96], sizes = [8, 32], strides = [1, 1]} : vector<8x128xf32> to vector<8x32xf32>
    %173 = math.tanh %172 : vector<8x32xf32>
    %174 = arith.mulf %170, %129 : vector<8x32xf32>
    %175 = arith.mulf %169, %173 : vector<8x32xf32>
    %176 = arith.addf %174, %175 : vector<8x32xf32>
    %177 = math.tanh %176 : vector<8x32xf32>
    %178 = arith.mulf %171, %177 : vector<8x32xf32>
    %179 = tpu.concatenate %178, %151 in 1 : vector<8x32xf32>, vector<8x32xf32> -> vector<8x64xf32>
    %cst_47 = arith.constant dense<0.000000e+00> : vector<8x128xf32>
    %180 = tpu.matmul %179, %4, %cst_47 {dimension_numbers = #tpu.dot_dimension_numbers<[1], [0], [0], [1], [0, 0, 1, 1], [], []>} : vector<8x64xf32>, vector<64x128xf32>, vector<8x128xf32> -> vector<8x128xf32>
    %181 = vector.broadcast %6 : vector<1x128xf32> to vector<8x128xf32>
    %182 = arith.addf %180, %181 : vector<8x128xf32>
    %183 = vector.extract_strided_slice %182 {offsets = [0, 0], sizes = [8, 96], strides = [1, 1]} : vector<8x128xf32> to vector<8x96xf32>
    %184 = arith.negf %183 : vector<8x96xf32>
    %185 = math.exp %184 : vector<8x96xf32>
    %cst_48 = arith.constant 1.000000e+00 : f32
    %186 = vector.broadcast %cst_48 : f32 to vector<8x96xf32>
    %187 = arith.addf %186, %185 : vector<8x96xf32>
    %188 = arith.divf %186, %187 : vector<8x96xf32>
    %189 = vector.extract_strided_slice %188 {offsets = [0, 0], sizes = [8, 32], strides = [1, 1]} : vector<8x96xf32> to vector<8x32xf32>
    %190 = vector.extract_strided_slice %188 {offsets = [0, 32], sizes = [8, 32], strides = [1, 1]} : vector<8x96xf32> to vector<8x32xf32>
    %191 = vector.extract_strided_slice %188 {offsets = [0, 64], sizes = [8, 32], strides = [1, 1]} : vector<8x96xf32> to vector<8x32xf32>
    %192 = vector.extract_strided_slice %182 {offsets = [0, 96], sizes = [8, 32], strides = [1, 1]} : vector<8x128xf32> to vector<8x32xf32>
    %193 = math.tanh %192 : vector<8x32xf32>
    %194 = arith.mulf %190, %149 : vector<8x32xf32>
    %195 = arith.mulf %189, %193 : vector<8x32xf32>
    %196 = arith.addf %194, %195 : vector<8x32xf32>
    %197 = math.tanh %196 : vector<8x32xf32>
    %198 = arith.mulf %191, %197 : vector<8x32xf32>
    %199 = arith.index_cast %c3_i32 : i32 to index
    %c0_49 = arith.constant 0 : index
    %c0_50 = arith.constant 0 : index
    %200 = vector.load %arg6[%199, %c0_49, %c0_50] : memref<8x8x32xf32, #tpu.memory_space<vmem>>, vector<1x8x32xf32>
    %201 = vector.shape_cast %200 : vector<1x8x32xf32> to vector<8x32xf32>
    %202 = vector.shape_cast %198 : vector<8x32xf32> to vector<1x8x32xf32>
    tpu.vector_store %arg6[%199, %c0_49, %c0_50], %202 {strides = array<i32>} : memref<8x8x32xf32, #tpu.memory_space<vmem>>, vector<1x8x32xf32>,
    %c4_i32 = arith.constant 4 : i32
    %203 = arith.index_cast %c4_i32 : i32 to index
    %c0_51 = arith.constant 0 : index
    %c0_52 = arith.constant 0 : index
    %204 = vector.load %arg1[%203, %c0_51, %c0_52] : memref<8x8x6xf32, #tpu.memory_space<vmem>>, vector<1x8x6xf32>
    %205 = vector.shape_cast %204 : vector<1x8x6xf32> to vector<8x6xf32>
    %206 = tpu.concatenate %205, %178 in 1 : vector<8x6xf32>, vector<8x32xf32> -> vector<8x38xf32>
    %cst_53 = arith.constant dense<0.000000e+00> : vector<8x128xf32>
    %207 = tpu.matmul %206, %3, %cst_53 {dimension_numbers = #tpu.dot_dimension_numbers<[1], [0], [0], [1], [0, 0, 1, 1], [], []>} : vector<8x38xf32>, vector<38x128xf32>, vector<8x128xf32> -> vector<8x128xf32>
    %208 = vector.broadcast %5 : vector<1x128xf32> to vector<8x128xf32>
    %209 = arith.addf %207, %208 : vector<8x128xf32>
    %210 = vector.extract_strided_slice %209 {offsets = [0, 0], sizes = [8, 96], strides = [1, 1]} : vector<8x128xf32> to vector<8x96xf32>
    %211 = arith.negf %210 : vector<8x96xf32>
    %212 = math.exp %211 : vector<8x96xf32>
    %cst_54 = arith.constant 1.000000e+00 : f32
    %213 = vector.broadcast %cst_54 : f32 to vector<8x96xf32>
    %214 = arith.addf %213, %212 : vector<8x96xf32>
    %215 = arith.divf %213, %214 : vector<8x96xf32>
    %216 = vector.extract_strided_slice %215 {offsets = [0, 0], sizes = [8, 32], strides = [1, 1]} : vector<8x96xf32> to vector<8x32xf32>
    %217 = vector.extract_strided_slice %215 {offsets = [0, 32], sizes = [8, 32], strides = [1, 1]} : vector<8x96xf32> to vector<8x32xf32>
    %218 = vector.extract_strided_slice %215 {offsets = [0, 64], sizes = [8, 32], strides = [1, 1]} : vector<8x96xf32> to vector<8x32xf32>
    %219 = vector.extract_strided_slice %209 {offsets = [0, 96], sizes = [8, 32], strides = [1, 1]} : vector<8x128xf32> to vector<8x32xf32>
    %220 = math.tanh %219 : vector<8x32xf32>
    %221 = arith.mulf %217, %176 : vector<8x32xf32>
    %222 = arith.mulf %216, %220 : vector<8x32xf32>
    %223 = arith.addf %221, %222 : vector<8x32xf32>
    %224 = math.tanh %223 : vector<8x32xf32>
    %225 = arith.mulf %218, %224 : vector<8x32xf32>
    %226 = tpu.concatenate %225, %198 in 1 : vector<8x32xf32>, vector<8x32xf32> -> vector<8x64xf32>
    %cst_55 = arith.constant dense<0.000000e+00> : vector<8x128xf32>
    %227 = tpu.matmul %226, %4, %cst_55 {dimension_numbers = #tpu.dot_dimension_numbers<[1], [0], [0], [1], [0, 0, 1, 1], [], []>} : vector<8x64xf32>, vector<64x128xf32>, vector<8x128xf32> -> vector<8x128xf32>
    %228 = vector.broadcast %6 : vector<1x128xf32> to vector<8x128xf32>
    %229 = arith.addf %227, %228 : vector<8x128xf32>
    %230 = vector.extract_strided_slice %229 {offsets = [0, 0], sizes = [8, 96], strides = [1, 1]} : vector<8x128xf32> to vector<8x96xf32>
    %231 = arith.negf %230 : vector<8x96xf32>
    %232 = math.exp %231 : vector<8x96xf32>
    %cst_56 = arith.constant 1.000000e+00 : f32
    %233 = vector.broadcast %cst_56 : f32 to vector<8x96xf32>
    %234 = arith.addf %233, %232 : vector<8x96xf32>
    %235 = arith.divf %233, %234 : vector<8x96xf32>
    %236 = vector.extract_strided_slice %235 {offsets = [0, 0], sizes = [8, 32], strides = [1, 1]} : vector<8x96xf32> to vector<8x32xf32>
    %237 = vector.extract_strided_slice %235 {offsets = [0, 32], sizes = [8, 32], strides = [1, 1]} : vector<8x96xf32> to vector<8x32xf32>
    %238 = vector.extract_strided_slice %235 {offsets = [0, 64], sizes = [8, 32], strides = [1, 1]} : vector<8x96xf32> to vector<8x32xf32>
    %239 = vector.extract_strided_slice %229 {offsets = [0, 96], sizes = [8, 32], strides = [1, 1]} : vector<8x128xf32> to vector<8x32xf32>
    %240 = math.tanh %239 : vector<8x32xf32>
    %241 = arith.mulf %237, %196 : vector<8x32xf32>
    %242 = arith.mulf %236, %240 : vector<8x32xf32>
    %243 = arith.addf %241, %242 : vector<8x32xf32>
    %244 = math.tanh %243 : vector<8x32xf32>
    %245 = arith.mulf %238, %244 : vector<8x32xf32>
    %246 = arith.index_cast %c4_i32 : i32 to index
    %c0_57 = arith.constant 0 : index
    %c0_58 = arith.constant 0 : index
    %247 = vector.load %arg6[%246, %c0_57, %c0_58] : memref<8x8x32xf32, #tpu.memory_space<vmem>>, vector<1x8x32xf32>
    %248 = vector.shape_cast %247 : vector<1x8x32xf32> to vector<8x32xf32>
    %249 = vector.shape_cast %245 : vector<8x32xf32> to vector<1x8x32xf32>
    tpu.vector_store %arg6[%246, %c0_57, %c0_58], %249 {strides = array<i32>} : memref<8x8x32xf32, #tpu.memory_space<vmem>>, vector<1x8x32xf32>,
    %c5_i32 = arith.constant 5 : i32
    %250 = arith.index_cast %c5_i32 : i32 to index
    %c0_59 = arith.constant 0 : index
    %c0_60 = arith.constant 0 : index
    %251 = vector.load %arg1[%250, %c0_59, %c0_60] : memref<8x8x6xf32, #tpu.memory_space<vmem>>, vector<1x8x6xf32>
    %252 = vector.shape_cast %251 : vector<1x8x6xf32> to vector<8x6xf32>
    %253 = tpu.concatenate %252, %225 in 1 : vector<8x6xf32>, vector<8x32xf32> -> vector<8x38xf32>
    %cst_61 = arith.constant dense<0.000000e+00> : vector<8x128xf32>
    %254 = tpu.matmul %253, %3, %cst_61 {dimension_numbers = #tpu.dot_dimension_numbers<[1], [0], [0], [1], [0, 0, 1, 1], [], []>} : vector<8x38xf32>, vector<38x128xf32>, vector<8x128xf32> -> vector<8x128xf32>
    %255 = vector.broadcast %5 : vector<1x128xf32> to vector<8x128xf32>
    %256 = arith.addf %254, %255 : vector<8x128xf32>
    %257 = vector.extract_strided_slice %256 {offsets = [0, 0], sizes = [8, 96], strides = [1, 1]} : vector<8x128xf32> to vector<8x96xf32>
    %258 = arith.negf %257 : vector<8x96xf32>
    %259 = math.exp %258 : vector<8x96xf32>
    %cst_62 = arith.constant 1.000000e+00 : f32
    %260 = vector.broadcast %cst_62 : f32 to vector<8x96xf32>
    %261 = arith.addf %260, %259 : vector<8x96xf32>
    %262 = arith.divf %260, %261 : vector<8x96xf32>
    %263 = vector.extract_strided_slice %262 {offsets = [0, 0], sizes = [8, 32], strides = [1, 1]} : vector<8x96xf32> to vector<8x32xf32>
    %264 = vector.extract_strided_slice %262 {offsets = [0, 32], sizes = [8, 32], strides = [1, 1]} : vector<8x96xf32> to vector<8x32xf32>
    %265 = vector.extract_strided_slice %262 {offsets = [0, 64], sizes = [8, 32], strides = [1, 1]} : vector<8x96xf32> to vector<8x32xf32>
    %266 = vector.extract_strided_slice %256 {offsets = [0, 96], sizes = [8, 32], strides = [1, 1]} : vector<8x128xf32> to vector<8x32xf32>
    %267 = math.tanh %266 : vector<8x32xf32>
    %268 = arith.mulf %264, %223 : vector<8x32xf32>
    %269 = arith.mulf %263, %267 : vector<8x32xf32>
    %270 = arith.addf %268, %269 : vector<8x32xf32>
    %271 = math.tanh %270 : vector<8x32xf32>
    %272 = arith.mulf %265, %271 : vector<8x32xf32>
    %273 = tpu.concatenate %272, %245 in 1 : vector<8x32xf32>, vector<8x32xf32> -> vector<8x64xf32>
    %cst_63 = arith.constant dense<0.000000e+00> : vector<8x128xf32>
    %274 = tpu.matmul %273, %4, %cst_63 {dimension_numbers = #tpu.dot_dimension_numbers<[1], [0], [0], [1], [0, 0, 1, 1], [], []>} : vector<8x64xf32>, vector<64x128xf32>, vector<8x128xf32> -> vector<8x128xf32>
    %275 = vector.broadcast %6 : vector<1x128xf32> to vector<8x128xf32>
    %276 = arith.addf %274, %275 : vector<8x128xf32>
    %277 = vector.extract_strided_slice %276 {offsets = [0, 0], sizes = [8, 96], strides = [1, 1]} : vector<8x128xf32> to vector<8x96xf32>
    %278 = arith.negf %277 : vector<8x96xf32>
    %279 = math.exp %278 : vector<8x96xf32>
    %cst_64 = arith.constant 1.000000e+00 : f32
    %280 = vector.broadcast %cst_64 : f32 to vector<8x96xf32>
    %281 = arith.addf %280, %279 : vector<8x96xf32>
    %282 = arith.divf %280, %281 : vector<8x96xf32>
    %283 = vector.extract_strided_slice %282 {offsets = [0, 0], sizes = [8, 32], strides = [1, 1]} : vector<8x96xf32> to vector<8x32xf32>
    %284 = vector.extract_strided_slice %282 {offsets = [0, 32], sizes = [8, 32], strides = [1, 1]} : vector<8x96xf32> to vector<8x32xf32>
    %285 = vector.extract_strided_slice %282 {offsets = [0, 64], sizes = [8, 32], strides = [1, 1]} : vector<8x96xf32> to vector<8x32xf32>
    %286 = vector.extract_strided_slice %276 {offsets = [0, 96], sizes = [8, 32], strides = [1, 1]} : vector<8x128xf32> to vector<8x32xf32>
    %287 = math.tanh %286 : vector<8x32xf32>
    %288 = arith.mulf %284, %243 : vector<8x32xf32>
    %289 = arith.mulf %283, %287 : vector<8x32xf32>
    %290 = arith.addf %288, %289 : vector<8x32xf32>
    %291 = math.tanh %290 : vector<8x32xf32>
    %292 = arith.mulf %285, %291 : vector<8x32xf32>
    %293 = arith.index_cast %c5_i32 : i32 to index
    %c0_65 = arith.constant 0 : index
    %c0_66 = arith.constant 0 : index
    %294 = vector.load %arg6[%293, %c0_65, %c0_66] : memref<8x8x32xf32, #tpu.memory_space<vmem>>, vector<1x8x32xf32>
    %295 = vector.shape_cast %294 : vector<1x8x32xf32> to vector<8x32xf32>
    %296 = vector.shape_cast %292 : vector<8x32xf32> to vector<1x8x32xf32>
    tpu.vector_store %arg6[%293, %c0_65, %c0_66], %296 {strides = array<i32>} : memref<8x8x32xf32, #tpu.memory_space<vmem>>, vector<1x8x32xf32>,
    %c6_i32 = arith.constant 6 : i32
    %297 = arith.index_cast %c6_i32 : i32 to index
    %c0_67 = arith.constant 0 : index
    %c0_68 = arith.constant 0 : index
    %298 = vector.load %arg1[%297, %c0_67, %c0_68] : memref<8x8x6xf32, #tpu.memory_space<vmem>>, vector<1x8x6xf32>
    %299 = vector.shape_cast %298 : vector<1x8x6xf32> to vector<8x6xf32>
    %300 = tpu.concatenate %299, %272 in 1 : vector<8x6xf32>, vector<8x32xf32> -> vector<8x38xf32>
    %cst_69 = arith.constant dense<0.000000e+00> : vector<8x128xf32>
    %301 = tpu.matmul %300, %3, %cst_69 {dimension_numbers = #tpu.dot_dimension_numbers<[1], [0], [0], [1], [0, 0, 1, 1], [], []>} : vector<8x38xf32>, vector<38x128xf32>, vector<8x128xf32> -> vector<8x128xf32>
    %302 = vector.broadcast %5 : vector<1x128xf32> to vector<8x128xf32>
    %303 = arith.addf %301, %302 : vector<8x128xf32>
    %304 = vector.extract_strided_slice %303 {offsets = [0, 0], sizes = [8, 96], strides = [1, 1]} : vector<8x128xf32> to vector<8x96xf32>
    %305 = arith.negf %304 : vector<8x96xf32>
    %306 = math.exp %305 : vector<8x96xf32>
    %cst_70 = arith.constant 1.000000e+00 : f32
    %307 = vector.broadcast %cst_70 : f32 to vector<8x96xf32>
    %308 = arith.addf %307, %306 : vector<8x96xf32>
    %309 = arith.divf %307, %308 : vector<8x96xf32>
    %310 = vector.extract_strided_slice %309 {offsets = [0, 0], sizes = [8, 32], strides = [1, 1]} : vector<8x96xf32> to vector<8x32xf32>
    %311 = vector.extract_strided_slice %309 {offsets = [0, 32], sizes = [8, 32], strides = [1, 1]} : vector<8x96xf32> to vector<8x32xf32>
    %312 = vector.extract_strided_slice %309 {offsets = [0, 64], sizes = [8, 32], strides = [1, 1]} : vector<8x96xf32> to vector<8x32xf32>
    %313 = vector.extract_strided_slice %303 {offsets = [0, 96], sizes = [8, 32], strides = [1, 1]} : vector<8x128xf32> to vector<8x32xf32>
    %314 = math.tanh %313 : vector<8x32xf32>
    %315 = arith.mulf %311, %270 : vector<8x32xf32>
    %316 = arith.mulf %310, %314 : vector<8x32xf32>
    %317 = arith.addf %315, %316 : vector<8x32xf32>
    %318 = math.tanh %317 : vector<8x32xf32>
    %319 = arith.mulf %312, %318 : vector<8x32xf32>
    %320 = tpu.concatenate %319, %292 in 1 : vector<8x32xf32>, vector<8x32xf32> -> vector<8x64xf32>
    %cst_71 = arith.constant dense<0.000000e+00> : vector<8x128xf32>
    %321 = tpu.matmul %320, %4, %cst_71 {dimension_numbers = #tpu.dot_dimension_numbers<[1], [0], [0], [1], [0, 0, 1, 1], [], []>} : vector<8x64xf32>, vector<64x128xf32>, vector<8x128xf32> -> vector<8x128xf32>
    %322 = vector.broadcast %6 : vector<1x128xf32> to vector<8x128xf32>
    %323 = arith.addf %321, %322 : vector<8x128xf32>
    %324 = vector.extract_strided_slice %323 {offsets = [0, 0], sizes = [8, 96], strides = [1, 1]} : vector<8x128xf32> to vector<8x96xf32>
    %325 = arith.negf %324 : vector<8x96xf32>
    %326 = math.exp %325 : vector<8x96xf32>
    %cst_72 = arith.constant 1.000000e+00 : f32
    %327 = vector.broadcast %cst_72 : f32 to vector<8x96xf32>
    %328 = arith.addf %327, %326 : vector<8x96xf32>
    %329 = arith.divf %327, %328 : vector<8x96xf32>
    %330 = vector.extract_strided_slice %329 {offsets = [0, 0], sizes = [8, 32], strides = [1, 1]} : vector<8x96xf32> to vector<8x32xf32>
    %331 = vector.extract_strided_slice %329 {offsets = [0, 32], sizes = [8, 32], strides = [1, 1]} : vector<8x96xf32> to vector<8x32xf32>
    %332 = vector.extract_strided_slice %329 {offsets = [0, 64], sizes = [8, 32], strides = [1, 1]} : vector<8x96xf32> to vector<8x32xf32>
    %333 = vector.extract_strided_slice %323 {offsets = [0, 96], sizes = [8, 32], strides = [1, 1]} : vector<8x128xf32> to vector<8x32xf32>
    %334 = math.tanh %333 : vector<8x32xf32>
    %335 = arith.mulf %331, %290 : vector<8x32xf32>
    %336 = arith.mulf %330, %334 : vector<8x32xf32>
    %337 = arith.addf %335, %336 : vector<8x32xf32>
    %338 = math.tanh %337 : vector<8x32xf32>
    %339 = arith.mulf %332, %338 : vector<8x32xf32>
    %340 = arith.index_cast %c6_i32 : i32 to index
    %c0_73 = arith.constant 0 : index
    %c0_74 = arith.constant 0 : index
    %341 = vector.load %arg6[%340, %c0_73, %c0_74] : memref<8x8x32xf32, #tpu.memory_space<vmem>>, vector<1x8x32xf32>
    %342 = vector.shape_cast %341 : vector<1x8x32xf32> to vector<8x32xf32>
    %343 = vector.shape_cast %339 : vector<8x32xf32> to vector<1x8x32xf32>
    tpu.vector_store %arg6[%340, %c0_73, %c0_74], %343 {strides = array<i32>} : memref<8x8x32xf32, #tpu.memory_space<vmem>>, vector<1x8x32xf32>,
    %c7_i32 = arith.constant 7 : i32
    %344 = arith.index_cast %c7_i32 : i32 to index
    %c0_75 = arith.constant 0 : index
    %c0_76 = arith.constant 0 : index
    %345 = vector.load %arg1[%344, %c0_75, %c0_76] : memref<8x8x6xf32, #tpu.memory_space<vmem>>, vector<1x8x6xf32>
    %346 = vector.shape_cast %345 : vector<1x8x6xf32> to vector<8x6xf32>
    %347 = tpu.concatenate %346, %319 in 1 : vector<8x6xf32>, vector<8x32xf32> -> vector<8x38xf32>
    %cst_77 = arith.constant dense<0.000000e+00> : vector<8x128xf32>
    %348 = tpu.matmul %347, %3, %cst_77 {dimension_numbers = #tpu.dot_dimension_numbers<[1], [0], [0], [1], [0, 0, 1, 1], [], []>} : vector<8x38xf32>, vector<38x128xf32>, vector<8x128xf32> -> vector<8x128xf32>
    %349 = vector.broadcast %5 : vector<1x128xf32> to vector<8x128xf32>
    %350 = arith.addf %348, %349 : vector<8x128xf32>
    %351 = vector.extract_strided_slice %350 {offsets = [0, 0], sizes = [8, 96], strides = [1, 1]} : vector<8x128xf32> to vector<8x96xf32>
    %352 = arith.negf %351 : vector<8x96xf32>
    %353 = math.exp %352 : vector<8x96xf32>
    %cst_78 = arith.constant 1.000000e+00 : f32
    %354 = vector.broadcast %cst_78 : f32 to vector<8x96xf32>
    %355 = arith.addf %354, %353 : vector<8x96xf32>
    %356 = arith.divf %354, %355 : vector<8x96xf32>
    %357 = vector.extract_strided_slice %356 {offsets = [0, 0], sizes = [8, 32], strides = [1, 1]} : vector<8x96xf32> to vector<8x32xf32>
    %358 = vector.extract_strided_slice %356 {offsets = [0, 32], sizes = [8, 32], strides = [1, 1]} : vector<8x96xf32> to vector<8x32xf32>
    %359 = vector.extract_strided_slice %356 {offsets = [0, 64], sizes = [8, 32], strides = [1, 1]} : vector<8x96xf32> to vector<8x32xf32>
    %360 = vector.extract_strided_slice %350 {offsets = [0, 96], sizes = [8, 32], strides = [1, 1]} : vector<8x128xf32> to vector<8x32xf32>
    %361 = math.tanh %360 : vector<8x32xf32>
    %362 = arith.mulf %358, %317 : vector<8x32xf32>
    %363 = arith.mulf %357, %361 : vector<8x32xf32>
    %364 = arith.addf %362, %363 : vector<8x32xf32>
    %365 = math.tanh %364 : vector<8x32xf32>
    %366 = arith.mulf %359, %365 : vector<8x32xf32>
    %367 = tpu.concatenate %366, %339 in 1 : vector<8x32xf32>, vector<8x32xf32> -> vector<8x64xf32>
    %cst_79 = arith.constant dense<0.000000e+00> : vector<8x128xf32>
    %368 = tpu.matmul %367, %4, %cst_79 {dimension_numbers = #tpu.dot_dimension_numbers<[1], [0], [0], [1], [0, 0, 1, 1], [], []>} : vector<8x64xf32>, vector<64x128xf32>, vector<8x128xf32> -> vector<8x128xf32>
    %369 = vector.broadcast %6 : vector<1x128xf32> to vector<8x128xf32>
    %370 = arith.addf %368, %369 : vector<8x128xf32>
    %371 = vector.extract_strided_slice %370 {offsets = [0, 0], sizes = [8, 96], strides = [1, 1]} : vector<8x128xf32> to vector<8x96xf32>
    %372 = arith.negf %371 : vector<8x96xf32>
    %373 = math.exp %372 : vector<8x96xf32>
    %cst_80 = arith.constant 1.000000e+00 : f32
    %374 = vector.broadcast %cst_80 : f32 to vector<8x96xf32>
    %375 = arith.addf %374, %373 : vector<8x96xf32>
    %376 = arith.divf %374, %375 : vector<8x96xf32>
    %377 = vector.extract_strided_slice %376 {offsets = [0, 0], sizes = [8, 32], strides = [1, 1]} : vector<8x96xf32> to vector<8x32xf32>
    %378 = vector.extract_strided_slice %376 {offsets = [0, 32], sizes = [8, 32], strides = [1, 1]} : vector<8x96xf32> to vector<8x32xf32>
    %379 = vector.extract_strided_slice %376 {offsets = [0, 64], sizes = [8, 32], strides = [1, 1]} : vector<8x96xf32> to vector<8x32xf32>
    %380 = vector.extract_strided_slice %370 {offsets = [0, 96], sizes = [8, 32], strides = [1, 1]} : vector<8x128xf32> to vector<8x32xf32>
    %381 = math.tanh %380 : vector<8x32xf32>
    %382 = arith.mulf %378, %337 : vector<8x32xf32>
    %383 = arith.mulf %377, %381 : vector<8x32xf32>
    %384 = arith.addf %382, %383 : vector<8x32xf32>
    %385 = math.tanh %384 : vector<8x32xf32>
    %386 = arith.mulf %379, %385 : vector<8x32xf32>
    %387 = arith.index_cast %c7_i32 : i32 to index
    %c0_81 = arith.constant 0 : index
    %c0_82 = arith.constant 0 : index
    %388 = vector.load %arg6[%387, %c0_81, %c0_82] : memref<8x8x32xf32, #tpu.memory_space<vmem>>, vector<1x8x32xf32>
    %389 = vector.shape_cast %388 : vector<1x8x32xf32> to vector<8x32xf32>
    %390 = vector.shape_cast %386 : vector<8x32xf32> to vector<1x8x32xf32>
    tpu.vector_store %arg6[%387, %c0_81, %c0_82], %390 {strides = array<i32>} : memref<8x8x32xf32, #tpu.memory_space<vmem>>, vector<1x8x32xf32>,
    %c8_i32 = arith.constant 8 : i32
    %c0_83 = arith.constant 0 : index
    %c0_84 = arith.constant 0 : index
    %c0_85 = arith.constant 0 : index
    %391 = vector.load %arg7[%c0_83, %c0_84, %c0_85] : memref<2x8x32xf32, #tpu.memory_space<vmem>>, vector<1x8x32xf32>
    %392 = vector.shape_cast %391 : vector<1x8x32xf32> to vector<8x32xf32>
    %393 = vector.shape_cast %366 : vector<8x32xf32> to vector<1x8x32xf32>
    tpu.vector_store %arg7[%c0_83, %c0_84, %c0_85], %393 {strides = array<i32>} : memref<2x8x32xf32, #tpu.memory_space<vmem>>, vector<1x8x32xf32>,
    %c0_86 = arith.constant 0 : index
    %c0_87 = arith.constant 0 : index
    %c0_88 = arith.constant 0 : index
    %394 = vector.load %arg8[%c0_86, %c0_87, %c0_88] : memref<2x8x32xf32, #tpu.memory_space<vmem>>, vector<1x8x32xf32>
    %395 = vector.shape_cast %394 : vector<1x8x32xf32> to vector<8x32xf32>
    %396 = vector.shape_cast %364 : vector<8x32xf32> to vector<1x8x32xf32>
    tpu.vector_store %arg8[%c0_86, %c0_87, %c0_88], %396 {strides = array<i32>} : memref<2x8x32xf32, #tpu.memory_space<vmem>>, vector<1x8x32xf32>,
    %c1_89 = arith.constant 1 : index
    %c0_90 = arith.constant 0 : index
    %c0_91 = arith.constant 0 : index
    %397 = vector.load %arg7[%c1_89, %c0_90, %c0_91] : memref<2x8x32xf32, #tpu.memory_space<vmem>>, vector<1x8x32xf32>
    %398 = vector.shape_cast %397 : vector<1x8x32xf32> to vector<8x32xf32>
    %399 = vector.shape_cast %386 : vector<8x32xf32> to vector<1x8x32xf32>
    tpu.vector_store %arg7[%c1_89, %c0_90, %c0_91], %399 {strides = array<i32>} : memref<2x8x32xf32, #tpu.memory_space<vmem>>, vector<1x8x32xf32>,
    %c1_92 = arith.constant 1 : index
    %c0_93 = arith.constant 0 : index
    %c0_94 = arith.constant 0 : index
    %400 = vector.load %arg8[%c1_92, %c0_93, %c0_94] : memref<2x8x32xf32, #tpu.memory_space<vmem>>, vector<1x8x32xf32>
    %401 = vector.shape_cast %400 : vector<1x8x32xf32> to vector<8x32xf32>
    %402 = vector.shape_cast %384 : vector<8x32xf32> to vector<1x8x32xf32>
    tpu.vector_store %arg8[%c1_92, %c0_93, %c0_94], %402 {strides = array<i32>} : memref<2x8x32xf32, #tpu.memory_space<vmem>>, vector<1x8x32xf32>,
    return
  }
  func.func @transform_0(%arg0: i32) -> (i32, i32, i32) {
    %c0_i32 = arith.constant 0 : i32
    %c0_i32_0 = arith.constant 0 : i32
    %c0_i32_1 = arith.constant 0 : i32
    return %arg0, %c0_i32, %c0_i32_0 : i32, i32, i32
  }
  func.func @transform_1(%arg0: i32) -> (i32, i32) {
    %c0_i32 = arith.constant 0 : i32
    %c0_i32_0 = arith.constant 0 : i32
    %c0_i32_1 = arith.constant 0 : i32
    return %c0_i32, %c0_i32_0 : i32, i32
  }
  func.func @transform_2(%arg0: i32) -> (i32, i32) {
    %c0_i32 = arith.constant 0 : i32
    %c0_i32_0 = arith.constant 0 : i32
    %c0_i32_1 = arith.constant 0 : i32
    return %c0_i32, %c0_i32_0 : i32, i32
  }
  func.func @transform_3(%arg0: i32) -> (i32, i32) {
    %c0_i32 = arith.constant 0 : i32
    %c0_i32_0 = arith.constant 0 : i32
    %c0_i32_1 = arith.constant 0 : i32
    return %c0_i32, %c0_i32_0 : i32, i32
  }
  func.func @transform_4(%arg0: i32) -> (i32, i32) {
    %c0_i32 = arith.constant 0 : i32
    %c0_i32_0 = arith.constant 0 : i32
    %c0_i32_1 = arith.constant 0 : i32
    return %c0_i32, %c0_i32_0 : i32, i32
  }
  func.func @transform_5(%arg0: i32) -> (i32, i32, i32) {
    %c0_i32 = arith.constant 0 : i32
    %c0_i32_0 = arith.constant 0 : i32
    %c0_i32_1 = arith.constant 0 : i32
    return %arg0, %c0_i32, %c0_i32_0 : i32, i32, i32
  }
}

</mosaic_0001>

<llo_original>
// kernel: tpu_custom_call.1
$region0: #{tpu_custom_call.1}
  #allocation0 [shape = 'u32[]', space=smem, size = 0x4, offset = 0x4, fixed_abs, tag = 'smem constant byte address 0x4 - core index']
  #allocation1 [shape = 'u32[144,128]{1,0:T(1,128)}', space=vmem, size = 0x12000, scoped, tag = 'internal scratch']
  #allocation2 [shape = 'f32[2,8,32]{2,1,0:T(8,128)}', space=vmem, size = 0x2000, scoped, tag = 'scratch operand']
  #allocation3 [shape = 'f32[2,8,32]{2,1,0:T(8,128)}', space=vmem, size = 0x2000, scoped, tag = 'scratch operand']
  %s0 = inlined_call_operand.vmem [shape: f32[8,8,6], index: 0, kind: input, shape index: {}]
  %s1 = inlined_call_operand.vmem [shape: f32[38,128], index: 1, kind: input, shape index: {}]
  %s2 = inlined_call_operand.vmem [shape: f32[1,128], index: 2, kind: input, shape index: {}]
  %s3 = inlined_call_operand.vmem [shape: f32[64,128], index: 3, kind: input, shape index: {}]
  %s4 = inlined_call_operand.vmem [shape: f32[1,128], index: 4, kind: input, shape index: {}]
  %s5 = inlined_call_operand.hbm [shape: f32[8,8,32], index: 5, kind: output, shape index: {}]
  %s6 = sld [smem:[#allocation0]]
  $region34: #{tpu_custom_call.1} parent=0
    _
  %s8 = ssub.s32 1, %s6
  %s9 = scalar_select 0, %s8, %s6
  $region1: #{tpu_custom_call.1} parent=0
    #allocation4 [shape = 'u8[32768]{0}', space=vmem, size = 0x8000, scoped, tag = 'output window, operand 0, single buffered']
    #allocation5 [shape = 's32[1]{0}', space=sflag, size = 0x4, scoped, tag = 'scoped memory for tpu_custom_call.1']
    %10 = vsyncpa [#allocation5], 0
    // Predicated region
    $region2: #{tpu_custom_call.1} parent=1 // pred_check
      _
    $region3: #{tpu_custom_call.1} parent=1 // pred_check_branch
      %12 = sbr.rel (0) target = $region5
    $region4: #{tpu_custom_call.1} parent=1 // pred_region
      _
    $region5: #{tpu_custom_call.1} parent=1 // pred_fallthru
      _
    // Predicated region
    $region6: #{tpu_custom_call.1} parent=1 // pred_check
      _
    $region7: #{tpu_custom_call.1} parent=1 // pred_check_branch
      %14 = sbr.rel (0) target = $region9
    $region8: #{tpu_custom_call.1} parent=1 // pred_region
      _
    $region9: #{tpu_custom_call.1} parent=1 // pred_fallthru
      _
    // Predicated region
    $region10: #{tpu_custom_call.1} parent=1 // pred_check
      _
    $region11: #{tpu_custom_call.1} parent=1 // pred_check_branch
      %16 = sbr.rel (0) target = $region13
    $region12: #{tpu_custom_call.1} parent=1 // pred_region
      _
    $region13: #{tpu_custom_call.1} parent=1 // pred_fallthru
      _
    // Predicated region
    $region14: #{tpu_custom_call.1} parent=1 // pred_check
      _
    $region15: #{tpu_custom_call.1} parent=1 // pred_check_branch
      %18 = sbr.rel (0) target = $region17
    $region16: #{tpu_custom_call.1} parent=1 // pred_region
      _
    $region17: #{tpu_custom_call.1} parent=1 // pred_fallthru
      _
    // Predicated region
    $region18: #{tpu_custom_call.1} parent=1 // pred_check
      _
    $region19: #{tpu_custom_call.1} parent=1 // pred_check_branch
      %20 = sbr.rel (0) target = $region21
    $region20: #{tpu_custom_call.1} parent=1 // pred_region
      _
    $region21: #{tpu_custom_call.1} parent=1 // pred_fallthru
      _
    %p21 = scmp.eq.s32.totalorder 0, 0
    // Predicated region
    $region22: #{tpu_custom_call.1} parent=1 // pred_check
      %p22 = pneg %p21
    $region23: #{tpu_custom_call.1} parent=1 // pred_check_branch
      %24 = sbr.rel (%p22) target = $region25
    $region24: #{tpu_custom_call.1} parent=1 // pred_region
      %vm25 = vcmask 261120
      %26 = vst.msk [vmem:[#allocation2] sm:$0xff] %vm25, 0.0
      %27 = vst.msk [vmem:[#allocation2 + $0x8] sm:$0xff] %vm25, 0.0
      %28 = vst.msk [vmem:[#allocation3] sm:$0xff] %vm25, 0.0
      %29 = vst.msk [vmem:[#allocation3 + $0x8] sm:$0xff] %vm25, 0.0
    $region25: #{tpu_custom_call.1} parent=1 // pred_fallthru
      _
    %v30 = vld [vmem:[%s1] sm:$0xff]
    %v31 = vld [vmem:[%s1 + $0x8] sm:$0xff]
    %v32 = vld [vmem:[%s1 + $0x10] sm:$0xff]
    %v33 = vld [vmem:[%s1 + $0x18] sm:$0xff]
    %v34 = vld [vmem:[%s1 + $0x20] sm:$0x3f]
    %v35 = vld [vmem:[%s3] sm:$0xff]
    %v36 = vld [vmem:[%s3 + $0x8] sm:$0xff]
    %v37 = vld [vmem:[%s3 + $0x10] sm:$0xff]
    %v38 = vld [vmem:[%s3 + $0x18] sm:$0xff]
    %v39 = vld [vmem:[%s3 + $0x20] sm:$0xff]
    %v40 = vld [vmem:[%s3 + $0x28] sm:$0xff]
    %v41 = vld [vmem:[%s3 + $0x30] sm:$0xff]
    %v42 = vld [vmem:[%s3 + $0x38] sm:$0xff]
    %v43 = vld [vmem:[%s2] sm:$0x1]
    %v44 = vld [vmem:[%s4] sm:$0x1]
    %v45 = vld [vmem:[#allocation2] sm:$0xff]
    %s46 = scalar_lea.vmem [#allocation2], 8
    %v47 = vld [vmem:[%s46] sm:$0xff]
    %v48 = vld [vmem:[#allocation3] sm:$0xff]
    %s49 = scalar_lea.vmem [#allocation3], 8
    %v50 = vld [vmem:[%s49] sm:$0xff]
    %v51 = vld [vmem:[%s0] sm:$0xff]
    %53 = vrot.lane.b32.xlu0 %v45, 6
    %v54 = vpop.permute.xlu0 %53
    %vm56 = vcmask 48128
    %v57 = vsel %vm56, %v51, %v54
    %v59 = vlaneseq
    %v60 = vshrl.u32 %v59, 7
    %v61 = vsub.s32 0, %v60
    %v62 = vrot.slane %v43, %v61
    %vm64 = vcmask 310272
    %v66 = vsel %vm64, %v57, 0
    %vm68 = vcmask 1045504
    %v70 = vsel %vm68, %v34, 0
    %72 = vmatprep.subr.mxu0 0.0
    %73 = vmatpush1.msra.mxu0 %v30
    %74 = vmatprep.subr.mxu0 0.0
    %75 = vmatpush1.msra.mxu0 %v31
    %76 = vmatprep.subr.mxu0 0.0
    %77 = vmatpush1.msra.mxu0 %v32
    %78 = vmatprep.subr.mxu0 0.0
    %79 = vmatpush1.msra.mxu0 %v33
    %80 = vmatprep.subr.mxu0 0.0
    %81 = vmatpush1.msra.mxu0 %v70
    %82 = vmatprep.subr.mxu0 0.0
    %83 = vmatpush1.msra.mxu0 0.0
    %84 = vmatprep.subr.mxu0 0.0
    %85 = vmatpush1.msra.mxu0 0.0
    %86 = vmatprep.subr.mxu0 0.0
    %87 = vmatpush1.msra.mxu0 0.0
    %88 = vmatprep.subr.mxu0 0.0
    %89 = vmatpush1.msra.mxu0 0.0
    %90 = vmatprep.subr.mxu0 0.0
    %91 = vmatpush1.msra.mxu0 0.0
    %92 = vmatprep.subr.mxu0 0.0
    %93 = vmatpush1.msra.mxu0 0.0
    %94 = vmatprep.subr.mxu0 0.0
    %95 = vmatpush1.msra.mxu0 0.0
    %96 = vmatprep.subr.mxu0 0.0
    %97 = vmatpush1.msra.mxu0 0.0
    %98 = vmatprep.subr.mxu0 0.0
    %99 = vmatpush1.msra.mxu0 0.0
    %100 = vmatprep.subr.mxu0 0.0
    %101 = vmatpush1.msra.mxu0 0.0
    %102 = vmatprep.subr.mxu0 0.0
    %103 = vmatpush1.msra.mxu0 0.0
    %104 = vmatprep.subr.mxu0 0.0
    %105 = vmatpush1.msra.mxu0 0.0
    %106 = vmatprep.subr.mxu0 0.0
    %107 = vmatpush1.msra.mxu0 0.0
    %108 = vmatprep.subr.mxu0 0.0
    %109 = vmatpush1.msra.mxu0 0.0
    %110 = vmatprep.subr.mxu0 0.0
    %111 = vmatpush1.msra.mxu0 0.0
    %112 = vmatprep.subr.mxu0 0.0
    %113 = vmatpush1.msra.mxu0 0.0
    %114 = vmatprep.subr.mxu0 0.0
    %115 = vmatpush1.msra.mxu0 0.0
    %116 = vmatprep.subr.mxu0 0.0
    %117 = vmatpush1.msra.mxu0 0.0
    %118 = vmatprep.subr.mxu0 0.0
    %119 = vmatpush1.msra.mxu0 0.0
    %120 = vmatprep.subr.mxu0 0.0
    %121 = vmatpush1.msra.mxu0 0.0
    %122 = vmatprep.subr.mxu0 0.0
    %123 = vmatpush1.msra.mxu0 0.0
    %124 = vmatprep.subr.mxu0 0.0
    %125 = vmatpush1.msra.mxu0 0.0
    %126 = vmatprep.subr.mxu0 0.0
    %127 = vmatpush1.msra.mxu0 0.0
    %128 = vmatprep.subr.mxu0 0.0
    %129 = vmatpush1.msra.mxu0 0.0
    %130 = vmatprep.subr.mxu0 0.0
    %131 = vmatpush1.msra.mxu0 0.0
    %132 = vmatprep.subr.mxu0 0.0
    %133 = vmatpush1.msra.mxu0 0.0
    %134 = vmatprep.subr.mxu0 0.0
    %135 = vmatpush1.msra.mxu0 0.0
    %136 = vmatprep.mubr.f32.mxu0 0.0
    %137 = vmatmul.mubr.f32.gmra.mrb[0].mxu0 %v66
    %v138 = vpop.f32.mrb[0].mxu0
    %v139 = vadd.f32 %v62, %v138
    %v140 = vpop.f32.mrb[0].mxu0
    %141 = vdwg.mxu0
    %v142 = vxor.u32 %v139, 2147483648
    %v143 = vmul.f32 %v142, 1.442695
    %v144 = vpow.pop %v143
    %v145 = vadd.f32 %v144, 1.0
    %v146 = vrcp.pop %v145
    %v147 = vmul.f32 1.0, %v146
    %v148 = vtanh.pop %v139
    %150 = vrot.lane.b32.xlu0 %v48, 32
    %v151 = vpop.permute.xlu0 %150
    %v153 = vmul.f32 %v147, %v151
    %155 = vrot.lane.b32.xlu0 %v148, 32
    %v156 = vpop.permute.xlu0 %155
    %v158 = vmul.f32 %v147, %v156
    %160 = vrot.lane.b32.xlu0 %v158, 32
    %v161 = vpop.permute.xlu0 %160
    %v163 = vadd.f32 %v153, %v161
    %v164 = vtanh.pop %v163
    %166 = vrot.lane.b32.xlu0 %v164, 32
    %v167 = vpop.permute.xlu0 %166
    %v169 = vmul.f32 %v147, %v167
    %171 = vrot.lane.b32.xlu0 %v169, 64
    %v172 = vpop.permute.xlu0 %171
    %175 = vrot.lane.b32.xlu0 %v47, 32
    %v176 = vpop.permute.xlu0 %175
    %vm178 = vcmask 261120
    %v179 = vsel %vm178, %v172, %v176
    %v181 = vlaneseq
    %v182 = vshrl.u32 %v181, 7
    %v183 = vsub.s32 0, %v182
    %v184 = vrot.slane %v44, %v183
    %vm186 = vcmask 523264
    %v188 = vsel %vm186, %v179, 0
    %190 = vmatprep.subr.mxu0 0.0
    %191 = vmatpush1.msra.mxu0 %v35
    %192 = vmatprep.subr.mxu0 0.0
    %193 = vmatpush1.msra.mxu0 %v36
    %194 = vmatprep.subr.mxu0 0.0
    %195 = vmatpush1.msra.mxu0 %v37
    %196 = vmatprep.subr.mxu0 0.0
    %197 = vmatpush1.msra.mxu0 %v38
    %198 = vmatprep.subr.mxu0 0.0
    %199 = vmatpush1.msra.mxu0 %v39
    %200 = vmatprep.subr.mxu0 0.0
    %201 = vmatpush1.msra.mxu0 %v40
    %202 = vmatprep.subr.mxu0 0.0
    %203 = vmatpush1.msra.mxu0 %v41
    %204 = vmatprep.subr.mxu0 0.0
    %205 = vmatpush1.msra.mxu0 %v42
    %206 = vmatprep.subr.mxu0 0.0
    %207 = vmatpush1.msra.mxu0 0.0
    %208 = vmatprep.subr.mxu0 0.0
    %209 = vmatpush1.msra.mxu0 0.0
    %210 = vmatprep.subr.mxu0 0.0
    %211 = vmatpush1.msra.mxu0 0.0
    %212 = vmatprep.subr.mxu0 0.0
    %213 = vmatpush1.msra.mxu0 0.0
    %214 = vmatprep.subr.mxu0 0.0
    %215 = vmatpush1.msra.mxu0 0.0
    %216 = vmatprep.subr.mxu0 0.0
    %217 = vmatpush1.msra.mxu0 0.0
    %218 = vmatprep.subr.mxu0 0.0
    %219 = vmatpush1.msra.mxu0 0.0
    %220 = vmatprep.subr.mxu0 0.0
    %221 = vmatpush1.msra.mxu0 0.0
    %222 = vmatprep.subr.mxu0 0.0
    %223 = vmatpush1.msra.mxu0 0.0
    %224 = vmatprep.subr.mxu0 0.0
    %225 = vmatpush1.msra.mxu0 0.0
    %226 = vmatprep.subr.mxu0 0.0
    %227 = vmatpush1.msra.mxu0 0.0
    %228 = vmatprep.subr.mxu0 0.0
    %229 = vmatpush1.msra.mxu0 0.0
    %230 = vmatprep.subr.mxu0 0.0
    %231 = vmatpush1.msra.mxu0 0.0
    %232 = vmatprep.subr.mxu0 0.0
    %233 = vmatpush1.msra.mxu0 0.0
    %234 = vmatprep.subr.mxu0 0.0
    %235 = vmatpush1.msra.mxu0 0.0
    %236 = vmatprep.subr.mxu0 0.0
    %237 = vmatpush1.msra.mxu0 0.0
    %238 = vmatprep.subr.mxu0 0.0
    %239 = vmatpush1.msra.mxu0 0.0
    %240 = vmatprep.subr.mxu0 0.0
    %241 = vmatpush1.msra.mxu0 0.0
    %242 = vmatprep.subr.mxu0 0.0
    %243 = vmatpush1.msra.mxu0 0.0
    %244 = vmatprep.subr.mxu0 0.0
    %245 = vmatpush1.msra.mxu0 0.0
    %246 = vmatprep.subr.mxu0 0.0
    %247 = vmatpush1.msra.mxu0 0.0
    %248 = vmatprep.subr.mxu0 0.0
    %249 = vmatpush1.msra.mxu0 0.0
    %250 = vmatprep.subr.mxu0 0.0
    %251 = vmatpush1.msra.mxu0 0.0
    %252 = vmatprep.subr.mxu0 0.0
    %253 = vmatpush1.msra.mxu0 0.0
    %254 = vmatprep.mubr.f32.mxu0 0.0
    %255 = vmatmul.mubr.f32.gmra.mrb[0].mxu0 %v188
    %v256 = vpop.f32.mrb[0].mxu0
    %v257 = vadd.f32 %v184, %v256
    %v258 = vpop.f32.mrb[0].mxu0
    %259 = vdwg.mxu0
    %v260 = vxor.u32 %v257, 2147483648
    %v261 = vmul.f32 %v260, 1.442695
    %v262 = vpow.pop %v261
    %v263 = vadd.f32 %v262, 1.0
    %v264 = vrcp.pop %v263
    %v265 = vmul.f32 1.0, %v264
    %v266 = vtanh.pop %v257
    %268 = vrot.lane.b32.xlu0 %v50, 32
    %v269 = vpop.permute.xlu0 %268
    %v271 = vmul.f32 %v265, %v269
    %273 = vrot.lane.b32.xlu0 %v266, 32
    %v274 = vpop.permute.xlu0 %273
    %v276 = vmul.f32 %v265, %v274
    %278 = vrot.lane.b32.xlu0 %v276, 32
    %v279 = vpop.permute.xlu0 %278
    %v281 = vadd.f32 %v271, %v279
    %v282 = vtanh.pop %v281
    %284 = vrot.lane.b32.xlu0 %v282, 32
    %v285 = vpop.permute.xlu0 %284
    %v287 = vmul.f32 %v265, %v285
    %289 = vrot.lane.b32.xlu0 %v287, 64
    %v290 = vpop.permute.xlu0 %289
    %292 = vst.msk [vmem:[#allocation4] sm:$0xff] %vm178, %v290
    %s293 = scalar_lea.vmem %s0, 8
    %v294 = vld [vmem:[%s293] sm:$0xff]
    %295 = vrot.lane.b32.xlu0 %v169, 70
    %v296 = vpop.permute.xlu0 %295
    %v298 = vsel %vm56, %v294, %v296
    %v300 = vsel %vm64, %v298, 0
    %302 = vmatprep.subr.mxu0 0.0
    %303 = vmatpush1.msra.mxu0 %v30
    %304 = vmatprep.subr.mxu0 0.0
    %305 = vmatpush1.msra.mxu0 %v31
    %306 = vmatprep.subr.mxu0 0.0
    %307 = vmatpush1.msra.mxu0 %v32
    %308 = vmatprep.subr.mxu0 0.0
    %309 = vmatpush1.msra.mxu0 %v33
    %310 = vmatprep.subr.mxu0 0.0
    %311 = vmatpush1.msra.mxu0 %v70
    %312 = vmatprep.subr.mxu0 0.0
    %313 = vmatpush1.msra.mxu0 0.0
    %314 = vmatprep.subr.mxu0 0.0
    %315 = vmatpush1.msra.mxu0 0.0
    %316 = vmatprep.subr.mxu0 0.0
    %317 = vmatpush1.msra.mxu0 0.0
    %318 = vmatprep.subr.mxu0 0.0
    %319 = vmatpush1.msra.mxu0 0.0
    %320 = vmatprep.subr.mxu0 0.0
    %321 = vmatpush1.msra.mxu0 0.0
    %322 = vmatprep.subr.mxu0 0.0
    %323 = vmatpush1.msra.mxu0 0.0
    %324 = vmatprep.subr.mxu0 0.0
    %325 = vmatpush1.msra.mxu0 0.0
    %326 = vmatprep.subr.mxu0 0.0
    %327 = vmatpush1.msra.mxu0 0.0
    %328 = vmatprep.subr.mxu0 0.0
    %329 = vmatpush1.msra.mxu0 0.0
    %330 = vmatprep.subr.mxu0 0.0
    %331 = vmatpush1.msra.mxu0 0.0
    %332 = vmatprep.subr.mxu0 0.0
    %333 = vmatpush1.msra.mxu0 0.0
    %334 = vmatprep.subr.mxu0 0.0
    %335 = vmatpush1.msra.mxu0 0.0
    %336 = vmatprep.subr.mxu0 0.0
    %337 = vmatpush1.msra.mxu0 0.0
    %338 = vmatprep.subr.mxu0 0.0
    %339 = vmatpush1.msra.mxu0 0.0
    %340 = vmatprep.subr.mxu0 0.0
    %341 = vmatpush1.msra.mxu0 0.0
    %342 = vmatprep.subr.mxu0 0.0
    %343 = vmatpush1.msra.mxu0 0.0
    %344 = vmatprep.subr.mxu0 0.0
    %345 = vmatpush1.msra.mxu0 0.0
    %346 = vmatprep.subr.mxu0 0.0
    %347 = vmatpush1.msra.mxu0 0.0
    %348 = vmatprep.subr.mxu0 0.0
    %349 = vmatpush1.msra.mxu0 0.0
    %350 = vmatprep.subr.mxu0 0.0
    %351 = vmatpush1.msra.mxu0 0.0
    %352 = vmatprep.subr.mxu0 0.0
    %353 = vmatpush1.msra.mxu0 0.0
    %354 = vmatprep.subr.mxu0 0.0
    %355 = vmatpush1.msra.mxu0 0.0
    %356 = vmatprep.subr.mxu0 0.0
    %357 = vmatpush1.msra.mxu0 0.0
    %358 = vmatprep.subr.mxu0 0.0
    %359 = vmatpush1.msra.mxu0 0.0
    %360 = vmatprep.subr.mxu0 0.0
    %361 = vmatpush1.msra.mxu0 0.0
    %362 = vmatprep.subr.mxu0 0.0
    %363 = vmatpush1.msra.mxu0 0.0
    %364 = vmatprep.subr.mxu0 0.0
    %365 = vmatpush1.msra.mxu0 0.0
    %366 = vmatprep.mubr.f32.mxu0 0.0
    %367 = vmatmul.mubr.f32.gmra.mrb[0].mxu0 %v300
    %v368 = vpop.f32.mrb[0].mxu0
    %v369 = vadd.f32 %v62, %v368
    %v370 = vpop.f32.mrb[0].mxu0
    %371 = vdwg.mxu0
    %v372 = vxor.u32 %v369, 2147483648
    %v373 = vmul.f32 %v372, 1.442695
    %v374 = vpow.pop %v373
    %v375 = vadd.f32 %v374, 1.0
    %v376 = vrcp.pop %v375
    %v377 = vmul.f32 1.0, %v376
    %v378 = vtanh.pop %v369
    %v379 = vmul.f32 %v377, %v163
    %381 = vrot.lane.b32.xlu0 %v378, 32
    %v382 = vpop.permute.xlu0 %381
    %v384 = vmul.f32 %v377, %v382
    %386 = vrot.lane.b32.xlu0 %v384, 32
    %v387 = vpop.permute.xlu0 %386
    %v389 = vadd.f32 %v379, %v387
    %v390 = vtanh.pop %v389
    %392 = vrot.lane.b32.xlu0 %v390, 32
    %v393 = vpop.permute.xlu0 %392
    %v395 = vmul.f32 %v377, %v393
    %397 = vrot.lane.b32.xlu0 %v395, 64
    %v398 = vpop.permute.xlu0 %397
    %400 = vrot.lane.b32.xlu0 %v287, 96
    %v401 = vpop.permute.xlu0 %400
    %v403 = vsel %vm178, %v398, %v401
    %v405 = vsel %vm186, %v403, 0
    %407 = vmatprep.subr.mxu0 0.0
    %408 = vmatpush1.msra.mxu0 %v35
    %409 = vmatprep.subr.mxu0 0.0
    %410 = vmatpush1.msra.mxu0 %v36
    %411 = vmatprep.subr.mxu0 0.0
    %412 = vmatpush1.msra.mxu0 %v37
    %413 = vmatprep.subr.mxu0 0.0
    %414 = vmatpush1.msra.mxu0 %v38
    %415 = vmatprep.subr.mxu0 0.0
    %416 = vmatpush1.msra.mxu0 %v39
    %417 = vmatprep.subr.mxu0 0.0
    %418 = vmatpush1.msra.mxu0 %v40
    %419 = vmatprep.subr.mxu0 0.0
    %420 = vmatpush1.msra.mxu0 %v41
    %421 = vmatprep.subr.mxu0 0.0
    %422 = vmatpush1.msra.mxu0 %v42
    %423 = vmatprep.subr.mxu0 0.0
    %424 = vmatpush1.msra.mxu0 0.0
    %425 = vmatprep.subr.mxu0 0.0
    %426 = vmatpush1.msra.mxu0 0.0
    %427 = vmatprep.subr.mxu0 0.0
    %428 = vmatpush1.msra.mxu0 0.0
    %429 = vmatprep.subr.mxu0 0.0
    %430 = vmatpush1.msra.mxu0 0.0
    %431 = vmatprep.subr.mxu0 0.0
    %432 = vmatpush1.msra.mxu0 0.0
    %433 = vmatprep.subr.mxu0 0.0
    %434 = vmatpush1.msra.mxu0 0.0
    %435 = vmatprep.subr.mxu0 0.0
    %436 = vmatpush1.msra.mxu0 0.0
    %437 = vmatprep.subr.mxu0 0.0
    %438 = vmatpush1.msra.mxu0 0.0
    %439 = vmatprep.subr.mxu0 0.0
    %440 = vmatpush1.msra.mxu0 0.0
    %441 = vmatprep.subr.mxu0 0.0
    %442 = vmatpush1.msra.mxu0 0.0
    %443 = vmatprep.subr.mxu0 0.0
    %444 = vmatpush1.msra.mxu0 0.0
    %445 = vmatprep.subr.mxu0 0.0
    %446 = vmatpush1.msra.mxu0 0.0
    %447 = vmatprep.subr.mxu0 0.0
    %448 = vmatpush1.msra.mxu0 0.0
    %449 = vmatprep.subr.mxu0 0.0
    %450 = vmatpush1.msra.mxu0 0.0
    %451 = vmatprep.subr.mxu0 0.0
    %452 = vmatpush1.msra.mxu0 0.0
    %453 = vmatprep.subr.mxu0 0.0
    %454 = vmatpush1.msra.mxu0 0.0
    %455 = vmatprep.subr.mxu0 0.0
    %456 = vmatpush1.msra.mxu0 0.0
    %457 = vmatprep.subr.mxu0 0.0
    %458 = vmatpush1.msra.mxu0 0.0
    %459 = vmatprep.subr.mxu0 0.0
    %460 = vmatpush1.msra.mxu0 0.0
    %461 = vmatprep.subr.mxu0 0.0
    %462 = vmatpush1.msra.mxu0 0.0
    %463 = vmatprep.subr.mxu0 0.0
    %464 = vmatpush1.msra.mxu0 0.0
    %465 = vmatprep.subr.mxu0 0.0
    %466 = vmatpush1.msra.mxu0 0.0
    %467 = vmatprep.subr.mxu0 0.0
    %468 = vmatpush1.msra.mxu0 0.0
    %469 = vmatprep.subr.mxu0 0.0
    %470 = vmatpush1.msra.mxu0 0.0
    %471 = vmatprep.mubr.f32.mxu0 0.0
    %472 = vmatmul.mubr.f32.gmra.mrb[0].mxu0 %v405
    %v473 = vpop.f32.mrb[0].mxu0
    %v474 = vadd.f32 %v184, %v473
    %v475 = vpop.f32.mrb[0].mxu0
    %476 = vdwg.mxu0
    %v477 = vxor.u32 %v474, 2147483648
    %v478 = vmul.f32 %v477, 1.442695
    %v479 = vpow.pop %v478
    %v480 = vadd.f32 %v479, 1.0
    %v481 = vrcp.pop %v480
    %v482 = vmul.f32 1.0, %v481
    %v483 = vtanh.pop %v474
    %v484 = vmul.f32 %v482, %v281
    %486 = vrot.lane.b32.xlu0 %v483, 32
    %v487 = vpop.permute.xlu0 %486
    %v489 = vmul.f32 %v482, %v487
    %491 = vrot.lane.b32.xlu0 %v489, 32
    %v492 = vpop.permute.xlu0 %491
    %v494 = vadd.f32 %v484, %v492
    %v495 = vtanh.pop %v494
    %497 = vrot.lane.b32.xlu0 %v495, 32
    %v498 = vpop.permute.xlu0 %497
    %v500 = vmul.f32 %v482, %v498
    %502 = vrot.lane.b32.xlu0 %v500, 64
    %v503 = vpop.permute.xlu0 %502
    %s505 = scalar_lea.vmem [#allocation4], 8
    %506 = vst.msk [vmem:[%s505] sm:$0xff] %vm178, %v503
    %s507 = scalar_lea.vmem %s0, 16
    %v508 = vld [vmem:[%s507] sm:$0xff]
    %509 = vrot.lane.b32.xlu0 %v395, 70
    %v510 = vpop.permute.xlu0 %509
    %v512 = vsel %vm56, %v508, %v510
    %v514 = vsel %vm64, %v512, 0
    %516 = vmatprep.subr.mxu0 0.0
    %517 = vmatpush1.msra.mxu0 %v30
    %518 = vmatprep.subr.mxu0 0.0
    %519 = vmatpush1.msra.mxu0 %v31
    %520 = vmatprep.subr.mxu0 0.0
    %521 = vmatpush1.msra.mxu0 %v32
    %522 = vmatprep.subr.mxu0 0.0
    %523 = vmatpush1.msra.mxu0 %v33
    %524 = vmatprep.subr.mxu0 0.0
    %525 = vmatpush1.msra.mxu0 %v70
    %526 = vmatprep.subr.mxu0 0.0
    %527 = vmatpush1.msra.mxu0 0.0
    %528 = vmatprep.subr.mxu0 0.0
    %529 = vmatpush1.msra.mxu0 0.0
    %530 = vmatprep.subr.mxu0 0.0
    %531 = vmatpush1.msra.mxu0 0.0
    %532 = vmatprep.subr.mxu0 0.0
    %533 = vmatpush1.msra.mxu0 0.0
    %534 = vmatprep.subr.mxu0 0.0
    %535 = vmatpush1.msra.mxu0 0.0
    %536 = vmatprep.subr.mxu0 0.0
    %537 = vmatpush1.msra.mxu0 0.0
    %538 = vmatprep.subr.mxu0 0.0
    %539 = vmatpush1.msra.mxu0 0.0
    %540 = vmatprep.subr.mxu0 0.0
    %541 = vmatpush1.msra.mxu0 0.0
    %542 = vmatprep.subr.mxu0 0.0
    %543 = vmatpush1.msra.mxu0 0.0
    %544 = vmatprep.subr.mxu0 0.0
    %545 = vmatpush1.msra.mxu0 0.0
    %546 = vmatprep.subr.mxu0 0.0
    %547 = vmatpush1.msra.mxu0 0.0
    %548 = vmatprep.subr.mxu0 0.0
    %549 = vmatpush1.msra.mxu0 0.0
    %550 = vmatprep.subr.mxu0 0.0
    %551 = vmatpush1.msra.mxu0 0.0
    %552 = vmatprep.subr.mxu0 0.0
    %553 = vmatpush1.msra.mxu0 0.0
    %554 = vmatprep.subr.mxu0 0.0
    %555 = vmatpush1.msra.mxu0 0.0
    %556 = vmatprep.subr.mxu0 0.0
    %557 = vmatpush1.msra.mxu0 0.0
    %558 = vmatprep.subr.mxu0 0.0
    %559 = vmatpush1.msra.mxu0 0.0
    %560 = vmatprep.subr.mxu0 0.0
    %561 = vmatpush1.msra.mxu0 0.0
    %562 = vmatprep.subr.mxu0 0.0
    %563 = vmatpush1.msra.mxu0 0.0
    %564 = vmatprep.subr.mxu0 0.0
    %565 = vmatpush1.msra.mxu0 0.0
    %566 = vmatprep.subr.mxu0 0.0
    %567 = vmatpush1.msra.mxu0 0.0
    %568 = vmatprep.subr.mxu0 0.0
    %569 = vmatpush1.msra.mxu0 0.0
    %570 = vmatprep.subr.mxu0 0.0
    %571 = vmatpush1.msra.mxu0 0.0
    %572 = vmatprep.subr.mxu0 0.0
    %573 = vmatpush1.msra.mxu0 0.0
    %574 = vmatprep.subr.mxu0 0.0
    %575 = vmatpush1.msra.mxu0 0.0
    %576 = vmatprep.subr.mxu0 0.0
    %577 = vmatpush1.msra.mxu0 0.0
    %578 = vmatprep.subr.mxu0 0.0
    %579 = vmatpush1.msra.mxu0 0.0
    %580 = vmatprep.mubr.f32.mxu0 0.0
    %581 = vmatmul.mubr.f32.gmra.mrb[0].mxu0 %v514
    %v582 = vpop.f32.mrb[0].mxu0
    %v583 = vadd.f32 %v62, %v582
    %v584 = vpop.f32.mrb[0].mxu0
    %585 = vdwg.mxu0
    %v586 = vxor.u32 %v583, 2147483648
    %v587 = vmul.f32 %v586, 1.442695
    %v588 = vpow.pop %v587
    %v589 = vadd.f32 %v588, 1.0
    %v590 = vrcp.pop %v589
    %v591 = vmul.f32 1.0, %v590
    %v592 = vtanh.pop %v583
    %v593 = vmul.f32 %v591, %v389
    %595 = vrot.lane.b32.xlu0 %v592, 32
    %v596 = vpop.permute.xlu0 %595
    %v598 = vmul.f32 %v591, %v596
    %600 = vrot.lane.b32.xlu0 %v598, 32
    %v601 = vpop.permute.xlu0 %600
    %v603 = vadd.f32 %v593, %v601
    %v604 = vtanh.pop %v603
    %606 = vrot.lane.b32.xlu0 %v604, 32
    %v607 = vpop.permute.xlu0 %606
    %v609 = vmul.f32 %v591, %v607
    %611 = vrot.lane.b32.xlu0 %v609, 64
    %v612 = vpop.permute.xlu0 %611
    %614 = vrot.lane.b32.xlu0 %v500, 96
    %v615 = vpop.permute.xlu0 %614
    %v617 = vsel %vm178, %v612, %v615
    %v619 = vsel %vm186, %v617, 0
    %621 = vmatprep.subr.mxu0 0.0
    %622 = vmatpush1.msra.mxu0 %v35
    %623 = vmatprep.subr.mxu0 0.0
    %624 = vmatpush1.msra.mxu0 %v36
    %625 = vmatprep.subr.mxu0 0.0
    %626 = vmatpush1.msra.mxu0 %v37
    %627 = vmatprep.subr.mxu0 0.0
    %628 = vmatpush1.msra.mxu0 %v38
    %629 = vmatprep.subr.mxu0 0.0
    %630 = vmatpush1.msra.mxu0 %v39
    %631 = vmatprep.subr.mxu0 0.0
    %632 = vmatpush1.msra.mxu0 %v40
    %633 = vmatprep.subr.mxu0 0.0
    %634 = vmatpush1.msra.mxu0 %v41
    %635 = vmatprep.subr.mxu0 0.0
    %636 = vmatpush1.msra.mxu0 %v42
    %637 = vmatprep.subr.mxu0 0.0
    %638 = vmatpush1.msra.mxu0 0.0
    %639 = vmatprep.subr.mxu0 0.0
    %640 = vmatpush1.msra.mxu0 0.0
    %641 = vmatprep.subr.mxu0 0.0
    %642 = vmatpush1.msra.mxu0 0.0
    %643 = vmatprep.subr.mxu0 0.0
    %644 = vmatpush1.msra.mxu0 0.0
    %645 = vmatprep.subr.mxu0 0.0
    %646 = vmatpush1.msra.mxu0 0.0
    %647 = vmatprep.subr.mxu0 0.0
    %648 = vmatpush1.msra.mxu0 0.0
    %649 = vmatprep.subr.mxu0 0.0
    %650 = vmatpush1.msra.mxu0 0.0
    %651 = vmatprep.subr.mxu0 0.0
    %652 = vmatpush1.msra.mxu0 0.0
    %653 = vmatprep.subr.mxu0 0.0
    %654 = vmatpush1.msra.mxu0 0.0
    %655 = vmatprep.subr.mxu0 0.0
    %656 = vmatpush1.msra.mxu0 0.0
    %657 = vmatprep.subr.mxu0 0.0
    %658 = vmatpush1.msra.mxu0 0.0
    %659 = vmatprep.subr.mxu0 0.0
    %660 = vmatpush1.msra.mxu0 0.0
    %661 = vmatprep.subr.mxu0 0.0
    %662 = vmatpush1.msra.mxu0 0.0
    %663 = vmatprep.subr.mxu0 0.0
    %664 = vmatpush1.msra.mxu0 0.0
    %665 = vmatprep.subr.mxu0 0.0
    %666 = vmatpush1.msra.mxu0 0.0
    %667 = vmatprep.subr.mxu0 0.0
    %668 = vmatpush1.msra.mxu0 0.0
    %669 = vmatprep.subr.mxu0 0.0
    %670 = vmatpush1.msra.mxu0 0.0
    %671 = vmatprep.subr.mxu0 0.0
    %672 = vmatpush1.msra.mxu0 0.0
    %673 = vmatprep.subr.mxu0 0.0
    %674 = vmatpush1.msra.mxu0 0.0
    %675 = vmatprep.subr.mxu0 0.0
    %676 = vmatpush1.msra.mxu0 0.0
    %677 = vmatprep.subr.mxu0 0.0
    %678 = vmatpush1.msra.mxu0 0.0
    %679 = vmatprep.subr.mxu0 0.0
    %680 = vmatpush1.msra.mxu0 0.0
    %681 = vmatprep.subr.mxu0 0.0
    %682 = vmatpush1.msra.mxu0 0.0
    %683 = vmatprep.subr.mxu0 0.0
    %684 = vmatpush1.msra.mxu0 0.0
    %685 = vmatprep.mubr.f32.mxu0 0.0
    %686 = vmatmul.mubr.f32.gmra.mrb[0].mxu0 %v619
    %v687 = vpop.f32.mrb[0].mxu0
    %v688 = vadd.f32 %v184, %v687
    %v689 = vpop.f32.mrb[0].mxu0
    %690 = vdwg.mxu0
    %v691 = vxor.u32 %v688, 2147483648
    %v692 = vmul.f32 %v691, 1.442695
    %v693 = vpow.pop %v692
    %v694 = vadd.f32 %v693, 1.0
    %v695 = vrcp.pop %v694
    %v696 = vmul.f32 1.0, %v695
    %v697 = vtanh.pop %v688
    %v698 = vmul.f32 %v696, %v494
    %700 = vrot.lane.b32.xlu0 %v697, 32
    %v701 = vpop.permute.xlu0 %700
    %v703 = vmul.f32 %v696, %v701
    %705 = vrot.lane.b32.xlu0 %v703, 32
    %v706 = vpop.permute.xlu0 %705
    %v708 = vadd.f32 %v698, %v706
    %v709 = vtanh.pop %v708
    %711 = vrot.lane.b32.xlu0 %v709, 32
    %v712 = vpop.permute.xlu0 %711
    %v714 = vmul.f32 %v696, %v712
    %716 = vrot.lane.b32.xlu0 %v714, 64
    %v717 = vpop.permute.xlu0 %716
    %s719 = scalar_lea.vmem [#allocation4], 16
    %720 = vst.msk [vmem:[%s719] sm:$0xff] %vm178, %v717
    %s721 = scalar_lea.vmem %s0, 24
    %v722 = vld [vmem:[%s721] sm:$0xff]
    %723 = vrot.lane.b32.xlu0 %v609, 70
    %v724 = vpop.permute.xlu0 %723
    %v726 = vsel %vm56, %v722, %v724
    %v728 = vsel %vm64, %v726, 0
    %730 = vmatprep.subr.mxu0 0.0
    %731 = vmatpush1.msra.mxu0 %v30
    %732 = vmatprep.subr.mxu0 0.0
    %733 = vmatpush1.msra.mxu0 %v31
    %734 = vmatprep.subr.mxu0 0.0
    %735 = vmatpush1.msra.mxu0 %v32
    %736 = vmatprep.subr.mxu0 0.0
    %737 = vmatpush1.msra.mxu0 %v33
    %738 = vmatprep.subr.mxu0 0.0
    %739 = vmatpush1.msra.mxu0 %v70
    %740 = vmatprep.subr.mxu0 0.0
    %741 = vmatpush1.msra.mxu0 0.0
    %742 = vmatprep.subr.mxu0 0.0
    %743 = vmatpush1.msra.mxu0 0.0
    %744 = vmatprep.subr.mxu0 0.0
    %745 = vmatpush1.msra.mxu0 0.0
    %746 = vmatprep.subr.mxu0 0.0
    %747 = vmatpush1.msra.mxu0 0.0
    %748 = vmatprep.subr.mxu0 0.0
    %749 = vmatpush1.msra.mxu0 0.0
    %750 = vmatprep.subr.mxu0 0.0
    %751 = vmatpush1.msra.mxu0 0.0
    %752 = vmatprep.subr.mxu0 0.0
    %753 = vmatpush1.msra.mxu0 0.0
    %754 = vmatprep.subr.mxu0 0.0
    %755 = vmatpush1.msra.mxu0 0.0
    %756 = vmatprep.subr.mxu0 0.0
    %757 = vmatpush1.msra.mxu0 0.0
    %758 = vmatprep.subr.mxu0 0.0
    %759 = vmatpush1.msra.mxu0 0.0
    %760 = vmatprep.subr.mxu0 0.0
    %761 = vmatpush1.msra.mxu0 0.0
    %762 = vmatprep.subr.mxu0 0.0
    %763 = vmatpush1.msra.mxu0 0.0
    %764 = vmatprep.subr.mxu0 0.0
    %765 = vmatpush1.msra.mxu0 0.0
    %766 = vmatprep.subr.mxu0 0.0
    %767 = vmatpush1.msra.mxu0 0.0
    %768 = vmatprep.subr.mxu0 0.0
    %769 = vmatpush1.msra.mxu0 0.0
    %770 = vmatprep.subr.mxu0 0.0
    %771 = vmatpush1.msra.mxu0 0.0
    %772 = vmatprep.subr.mxu0 0.0
    %773 = vmatpush1.msra.mxu0 0.0
    %774 = vmatprep.subr.mxu0 0.0
    %775 = vmatpush1.msra.mxu0 0.0
    %776 = vmatprep.subr.mxu0 0.0
    %777 = vmatpush1.msra.mxu0 0.0
    %778 = vmatprep.subr.mxu0 0.0
    %779 = vmatpush1.msra.mxu0 0.0
    %780 = vmatprep.subr.mxu0 0.0
    %781 = vmatpush1.msra.mxu0 0.0
    %782 = vmatprep.subr.mxu0 0.0
    %783 = vmatpush1.msra.mxu0 0.0
    %784 = vmatprep.subr.mxu0 0.0
    %785 = vmatpush1.msra.mxu0 0.0
    %786 = vmatprep.subr.mxu0 0.0
    %787 = vmatpush1.msra.mxu0 0.0
    %788 = vmatprep.subr.mxu0 0.0
    %789 = vmatpush1.msra.mxu0 0.0
    %790 = vmatprep.subr.mxu0 0.0
    %791 = vmatpush1.msra.mxu0 0.0
    %792 = vmatprep.subr.mxu0 0.0
    %793 = vmatpush1.msra.mxu0 0.0
    %794 = vmatprep.mubr.f32.mxu0 0.0
    %795 = vmatmul.mubr.f32.gmra.mrb[0].mxu0 %v728
    %v796 = vpop.f32.mrb[0].mxu0
    %v797 = vadd.f32 %v62, %v796
    %v798 = vpop.f32.mrb[0].mxu0
    %799 = vdwg.mxu0
    %v800 = vxor.u32 %v797, 2147483648
    %v801 = vmul.f32 %v800, 1.442695
    %v802 = vpow.pop %v801
    %v803 = vadd.f32 %v802, 1.0
    %v804 = vrcp.pop %v803
    %v805 = vmul.f32 1.0, %v804
    %v806 = vtanh.pop %v797
    %v807 = vmul.f32 %v805, %v603
    %809 = vrot.lane.b32.xlu0 %v806, 32
    %v810 = vpop.permute.xlu0 %809
    %v812 = vmul.f32 %v805, %v810
    %814 = vrot.lane.b32.xlu0 %v812, 32
    %v815 = vpop.permute.xlu0 %814
    %v817 = vadd.f32 %v807, %v815
    %v818 = vtanh.pop %v817
    %820 = vrot.lane.b32.xlu0 %v818, 32
    %v821 = vpop.permute.xlu0 %820
    %v823 = vmul.f32 %v805, %v821
    %825 = vrot.lane.b32.xlu0 %v823, 64
    %v826 = vpop.permute.xlu0 %825
    %828 = vrot.lane.b32.xlu0 %v714, 96
    %v829 = vpop.permute.xlu0 %828
    %v831 = vsel %vm178, %v826, %v829
    %v833 = vsel %vm186, %v831, 0
    %835 = vmatprep.subr.mxu0 0.0
    %836 = vmatpush1.msra.mxu0 %v35
    %837 = vmatprep.subr.mxu0 0.0
    %838 = vmatpush1.msra.mxu0 %v36
    %839 = vmatprep.subr.mxu0 0.0
    %840 = vmatpush1.msra.mxu0 %v37
    %841 = vmatprep.subr.mxu0 0.0
    %842 = vmatpush1.msra.mxu0 %v38
    %843 = vmatprep.subr.mxu0 0.0
    %844 = vmatpush1.msra.mxu0 %v39
    %845 = vmatprep.subr.mxu0 0.0
    %846 = vmatpush1.msra.mxu0 %v40
    %847 = vmatprep.subr.mxu0 0.0
    %848 = vmatpush1.msra.mxu0 %v41
    %849 = vmatprep.subr.mxu0 0.0
    %850 = vmatpush1.msra.mxu0 %v42
    %851 = vmatprep.subr.mxu0 0.0
    %852 = vmatpush1.msra.mxu0 0.0
    %853 = vmatprep.subr.mxu0 0.0
    %854 = vmatpush1.msra.mxu0 0.0
    %855 = vmatprep.subr.mxu0 0.0
    %856 = vmatpush1.msra.mxu0 0.0
    %857 = vmatprep.subr.mxu0 0.0
    %858 = vmatpush1.msra.mxu0 0.0
    %859 = vmatprep.subr.mxu0 0.0
    %860 = vmatpush1.msra.mxu0 0.0
    %861 = vmatprep.subr.mxu0 0.0
    %862 = vmatpush1.msra.mxu0 0.0
    %863 = vmatprep.subr.mxu0 0.0
    %864 = vmatpush1.msra.mxu0 0.0
    %865 = vmatprep.subr.mxu0 0.0
    %866 = vmatpush1.msra.mxu0 0.0
    %867 = vmatprep.subr.mxu0 0.0
    %868 = vmatpush1.msra.mxu0 0.0
    %869 = vmatprep.subr.mxu0 0.0
    %870 = vmatpush1.msra.mxu0 0.0
    %871 = vmatprep.subr.mxu0 0.0
    %872 = vmatpush1.msra.mxu0 0.0
    %873 = vmatprep.subr.mxu0 0.0
    %874 = vmatpush1.msra.mxu0 0.0
    %875 = vmatprep.subr.mxu0 0.0
    %876 = vmatpush1.msra.mxu0 0.0
    %877 = vmatprep.subr.mxu0 0.0
    %878 = vmatpush1.msra.mxu0 0.0
    %879 = vmatprep.subr.mxu0 0.0
    %880 = vmatpush1.msra.mxu0 0.0
    %881 = vmatprep.subr.mxu0 0.0
    %882 = vmatpush1.msra.mxu0 0.0
    %883 = vmatprep.subr.mxu0 0.0
    %884 = vmatpush1.msra.mxu0 0.0
    %885 = vmatprep.subr.mxu0 0.0
    %886 = vmatpush1.msra.mxu0 0.0
    %887 = vmatprep.subr.mxu0 0.0
    %888 = vmatpush1.msra.mxu0 0.0
    %889 = vmatprep.subr.mxu0 0.0
    %890 = vmatpush1.msra.mxu0 0.0
    %891 = vmatprep.subr.mxu0 0.0
    %892 = vmatpush1.msra.mxu0 0.0
    %893 = vmatprep.subr.mxu0 0.0
    %894 = vmatpush1.msra.mxu0 0.0
    %895 = vmatprep.subr.mxu0 0.0
    %896 = vmatpush1.msra.mxu0 0.0
    %897 = vmatprep.subr.mxu0 0.0
    %898 = vmatpush1.msra.mxu0 0.0
    %899 = vmatprep.mubr.f32.mxu0 0.0
    %900 = vmatmul.mubr.f32.gmra.mrb[0].mxu0 %v833
    %v901 = vpop.f32.mrb[0].mxu0
    %v902 = vadd.f32 %v184, %v901
    %v903 = vpop.f32.mrb[0].mxu0
    %904 = vdwg.mxu0
    %v905 = vxor.u32 %v902, 2147483648
    %v906 = vmul.f32 %v905, 1.442695
    %v907 = vpow.pop %v906
    %v908 = vadd.f32 %v907, 1.0
    %v909 = vrcp.pop %v908
    %v910 = vmul.f32 1.0, %v909
    %v911 = vtanh.pop %v902
    %v912 = vmul.f32 %v910, %v708
    %914 = vrot.lane.b32.xlu0 %v911, 32
    %v915 = vpop.permute.xlu0 %914
    %v917 = vmul.f32 %v910, %v915
    %919 = vrot.lane.b32.xlu0 %v917, 32
    %v920 = vpop.permute.xlu0 %919
    %v922 = vadd.f32 %v912, %v920
    %v923 = vtanh.pop %v922
    %925 = vrot.lane.b32.xlu0 %v923, 32
    %v926 = vpop.permute.xlu0 %925
    %v928 = vmul.f32 %v910, %v926
    %930 = vrot.lane.b32.xlu0 %v928, 64
    %v931 = vpop.permute.xlu0 %930
    %s933 = scalar_lea.vmem [#allocation4], 24
    %934 = vst.msk [vmem:[%s933] sm:$0xff] %vm178, %v931
    %s935 = scalar_lea.vmem %s0, 32
    %v936 = vld [vmem:[%s935] sm:$0xff]
    %937 = vrot.lane.b32.xlu0 %v823, 70
    %v938 = vpop.permute.xlu0 %937
    %v940 = vsel %vm56, %v936, %v938
    %v942 = vsel %vm64, %v940, 0
    %944 = vmatprep.subr.mxu0 0.0
    %945 = vmatpush1.msra.mxu0 %v30
    %946 = vmatprep.subr.mxu0 0.0
    %947 = vmatpush1.msra.mxu0 %v31
    %948 = vmatprep.subr.mxu0 0.0
    %949 = vmatpush1.msra.mxu0 %v32
    %950 = vmatprep.subr.mxu0 0.0
    %951 = vmatpush1.msra.mxu0 %v33
    %952 = vmatprep.subr.mxu0 0.0
    %953 = vmatpush1.msra.mxu0 %v70
    %954 = vmatprep.subr.mxu0 0.0
    %955 = vmatpush1.msra.mxu0 0.0
    %956 = vmatprep.subr.mxu0 0.0
    %957 = vmatpush1.msra.mxu0 0.0
    %958 = vmatprep.subr.mxu0 0.0
    %959 = vmatpush1.msra.mxu0 0.0
    %960 = vmatprep.subr.mxu0 0.0
    %961 = vmatpush1.msra.mxu0 0.0
    %962 = vmatprep.subr.mxu0 0.0
    %963 = vmatpush1.msra.mxu0 0.0
    %964 = vmatprep.subr.mxu0 0.0
    %965 = vmatpush1.msra.mxu0 0.0
    %966 = vmatprep.subr.mxu0 0.0
    %967 = vmatpush1.msra.mxu0 0.0
    %968 = vmatprep.subr.mxu0 0.0
    %969 = vmatpush1.msra.mxu0 0.0
    %970 = vmatprep.subr.mxu0 0.0
    %971 = vmatpush1.msra.mxu0 0.0
    %972 = vmatprep.subr.mxu0 0.0
    %973 = vmatpush1.msra.mxu0 0.0
    %974 = vmatprep.subr.mxu0 0.0
    %975 = vmatpush1.msra.mxu0 0.0
    %976 = vmatprep.subr.mxu0 0.0
    %977 = vmatpush1.msra.mxu0 0.0
    %978 = vmatprep.subr.mxu0 0.0
    %979 = vmatpush1.msra.mxu0 0.0
    %980 = vmatprep.subr.mxu0 0.0
    %981 = vmatpush1.msra.mxu0 0.0
    %982 = vmatprep.subr.mxu0 0.0
    %983 = vmatpush1.msra.mxu0 0.0
    %984 = vmatprep.subr.mxu0 0.0
    %985 = vmatpush1.msra.mxu0 0.0
    %986 = vmatprep.subr.mxu0 0.0
    %987 = vmatpush1.msra.mxu0 0.0
    %988 = vmatprep.subr.mxu0 0.0
    %989 = vmatpush1.msra.mxu0 0.0
    %990 = vmatprep.subr.mxu0 0.0
    %991 = vmatpush1.msra.mxu0 0.0
    %992 = vmatprep.subr.mxu0 0.0
    %993 = vmatpush1.msra.mxu0 0.0
    %994 = vmatprep.subr.mxu0 0.0
    %995 = vmatpush1.msra.mxu0 0.0
    %996 = vmatprep.subr.mxu0 0.0
    %997 = vmatpush1.msra.mxu0 0.0
    %998 = vmatprep.subr.mxu0 0.0
    %999 = vmatpush1.msra.mxu0 0.0
    %1000 = vmatprep.subr.mxu0 0.0
    %1001 = vmatpush1.msra.mxu0 0.0
    %1002 = vmatprep.subr.mxu0 0.0
    %1003 = vmatpush1.msra.mxu0 0.0
    %1004 = vmatprep.subr.mxu0 0.0
    %1005 = vmatpush1.msra.mxu0 0.0
    %1006 = vmatprep.subr.mxu0 0.0
    %1007 = vmatpush1.msra.mxu0 0.0
    %1008 = vmatprep.mubr.f32.mxu0 0.0
    %1009 = vmatmul.mubr.f32.gmra.mrb[0].mxu0 %v942
    %v1010 = vpop.f32.mrb[0].mxu0
    %v1011 = vadd.f32 %v62, %v1010
    %v1012 = vpop.f32.mrb[0].mxu0
    %1013 = vdwg.mxu0
    %v1014 = vxor.u32 %v1011, 2147483648
    %v1015 = vmul.f32 %v1014, 1.442695
    %v1016 = vpow.pop %v1015
    %v1017 = vadd.f32 %v1016, 1.0
    %v1018 = vrcp.pop %v1017
    %v1019 = vmul.f32 1.0, %v1018
    %v1020 = vtanh.pop %v1011
    %v1021 = vmul.f32 %v1019, %v817
    %1023 = vrot.lane.b32.xlu0 %v1020, 32
    %v1024 = vpop.permute.xlu0 %1023
    %v1026 = vmul.f32 %v1019, %v1024
    %1028 = vrot.lane.b32.xlu0 %v1026, 32
    %v1029 = vpop.permute.xlu0 %1028
    %v1031 = vadd.f32 %v1021, %v1029
    %v1032 = vtanh.pop %v1031
    %1034 = vrot.lane.b32.xlu0 %v1032, 32
    %v1035 = vpop.permute.xlu0 %1034
    %v1037 = vmul.f32 %v1019, %v1035
    %1039 = vrot.lane.b32.xlu0 %v1037, 64
    %v1040 = vpop.permute.xlu0 %1039
    %1042 = vrot.lane.b32.xlu0 %v928, 96
    %v1043 = vpop.permute.xlu0 %1042
    %v1045 = vsel %vm178, %v1040, %v1043
    %v1047 = vsel %vm186, %v1045, 0
    %1049 = vmatprep.subr.mxu0 0.0
    %1050 = vmatpush1.msra.mxu0 %v35
    %1051 = vmatprep.subr.mxu0 0.0
    %1052 = vmatpush1.msra.mxu0 %v36
    %1053 = vmatprep.subr.mxu0 0.0
    %1054 = vmatpush1.msra.mxu0 %v37
    %1055 = vmatprep.subr.mxu0 0.0
    %1056 = vmatpush1.msra.mxu0 %v38
    %1057 = vmatprep.subr.mxu0 0.0
    %1058 = vmatpush1.msra.mxu0 %v39
    %1059 = vmatprep.subr.mxu0 0.0
    %1060 = vmatpush1.msra.mxu0 %v40
    %1061 = vmatprep.subr.mxu0 0.0
    %1062 = vmatpush1.msra.mxu0 %v41
    %1063 = vmatprep.subr.mxu0 0.0
    %1064 = vmatpush1.msra.mxu0 %v42
    %1065 = vmatprep.subr.mxu0 0.0
    %1066 = vmatpush1.msra.mxu0 0.0
    %1067 = vmatprep.subr.mxu0 0.0
    %1068 = vmatpush1.msra.mxu0 0.0
    %1069 = vmatprep.subr.mxu0 0.0
    %1070 = vmatpush1.msra.mxu0 0.0
    %1071 = vmatprep.subr.mxu0 0.0
    %1072 = vmatpush1.msra.mxu0 0.0
    %1073 = vmatprep.subr.mxu0 0.0
    %1074 = vmatpush1.msra.mxu0 0.0
    %1075 = vmatprep.subr.mxu0 0.0
    %1076 = vmatpush1.msra.mxu0 0.0
    %1077 = vmatprep.subr.mxu0 0.0
    %1078 = vmatpush1.msra.mxu0 0.0
    %1079 = vmatprep.subr.mxu0 0.0
    %1080 = vmatpush1.msra.mxu0 0.0
    %1081 = vmatprep.subr.mxu0 0.0
    %1082 = vmatpush1.msra.mxu0 0.0
    %1083 = vmatprep.subr.mxu0 0.0
    %1084 = vmatpush1.msra.mxu0 0.0
    %1085 = vmatprep.subr.mxu0 0.0
    %1086 = vmatpush1.msra.mxu0 0.0
    %1087 = vmatprep.subr.mxu0 0.0
    %1088 = vmatpush1.msra.mxu0 0.0
    %1089 = vmatprep.subr.mxu0 0.0
    %1090 = vmatpush1.msra.mxu0 0.0
    %1091 = vmatprep.subr.mxu0 0.0
    %1092 = vmatpush1.msra.mxu0 0.0
    %1093 = vmatprep.subr.mxu0 0.0
    %1094 = vmatpush1.msra.mxu0 0.0
    %1095 = vmatprep.subr.mxu0 0.0
    %1096 = vmatpush1.msra.mxu0 0.0
    %1097 = vmatprep.subr.mxu0 0.0
    %1098 = vmatpush1.msra.mxu0 0.0
    %1099 = vmatprep.subr.mxu0 0.0
    %1100 = vmatpush1.msra.mxu0 0.0
    %1101 = vmatprep.subr.mxu0 0.0
    %1102 = vmatpush1.msra.mxu0 0.0
    %1103 = vmatprep.subr.mxu0 0.0
    %1104 = vmatpush1.msra.mxu0 0.0
    %1105 = vmatprep.subr.mxu0 0.0
    %1106 = vmatpush1.msra.mxu0 0.0
    %1107 = vmatprep.subr.mxu0 0.0
    %1108 = vmatpush1.msra.mxu0 0.0
    %1109 = vmatprep.subr.mxu0 0.0
    %1110 = vmatpush1.msra.mxu0 0.0
    %1111 = vmatprep.subr.mxu0 0.0
    %1112 = vmatpush1.msra.mxu0 0.0
    %1113 = vmatprep.mubr.f32.mxu0 0.0
    %1114 = vmatmul.mubr.f32.gmra.mrb[0].mxu0 %v1047
    %v1115 = vpop.f32.mrb[0].mxu0
    %v1116 = vadd.f32 %v184, %v1115
    %v1117 = vpop.f32.mrb[0].mxu0
    %1118 = vdwg.mxu0
    %v1119 = vxor.u32 %v1116, 2147483648
    %v1120 = vmul.f32 %v1119, 1.442695
    %v1121 = vpow.pop %v1120
    %v1122 = vadd.f32 %v1121, 1.0
    %v1123 = vrcp.pop %v1122
    %v1124 = vmul.f32 1.0, %v1123
    %v1125 = vtanh.pop %v1116
    %v1126 = vmul.f32 %v1124, %v922
    %1128 = vrot.lane.b32.xlu0 %v1125, 32
    %v1129 = vpop.permute.xlu0 %1128
    %v1131 = vmul.f32 %v1124, %v1129
    %1133 = vrot.lane.b32.xlu0 %v1131, 32
    %v1134 = vpop.permute.xlu0 %1133
    %v1136 = vadd.f32 %v1126, %v1134
    %v1137 = vtanh.pop %v1136
    %1139 = vrot.lane.b32.xlu0 %v1137, 32
    %v1140 = vpop.permute.xlu0 %1139
    %v1142 = vmul.f32 %v1124, %v1140
    %1144 = vrot.lane.b32.xlu0 %v1142, 64
    %v1145 = vpop.permute.xlu0 %1144
    %s1147 = scalar_lea.vmem [#allocation4], 32
    %1148 = vst.msk [vmem:[%s1147] sm:$0xff] %vm178, %v1145
    %s1149 = scalar_lea.vmem %s0, 40
    %v1150 = vld [vmem:[%s1149] sm:$0xff]
    %1151 = vrot.lane.b32.xlu0 %v1037, 70
    %v1152 = vpop.permute.xlu0 %1151
    %v1154 = vsel %vm56, %v1150, %v1152
    %v1156 = vsel %vm64, %v1154, 0
    %1158 = vmatprep.subr.mxu0 0.0
    %1159 = vmatpush1.msra.mxu0 %v30
    %1160 = vmatprep.subr.mxu0 0.0
    %1161 = vmatpush1.msra.mxu0 %v31
    %1162 = vmatprep.subr.mxu0 0.0
    %1163 = vmatpush1.msra.mxu0 %v32
    %1164 = vmatprep.subr.mxu0 0.0
    %1165 = vmatpush1.msra.mxu0 %v33
    %1166 = vmatprep.subr.mxu0 0.0
    %1167 = vmatpush1.msra.mxu0 %v70
    %1168 = vmatprep.subr.mxu0 0.0
    %1169 = vmatpush1.msra.mxu0 0.0
    %1170 = vmatprep.subr.mxu0 0.0
    %1171 = vmatpush1.msra.mxu0 0.0
    %1172 = vmatprep.subr.mxu0 0.0
    %1173 = vmatpush1.msra.mxu0 0.0
    %1174 = vmatprep.subr.mxu0 0.0
    %1175 = vmatpush1.msra.mxu0 0.0
    %1176 = vmatprep.subr.mxu0 0.0
    %1177 = vmatpush1.msra.mxu0 0.0
    %1178 = vmatprep.subr.mxu0 0.0
    %1179 = vmatpush1.msra.mxu0 0.0
    %1180 = vmatprep.subr.mxu0 0.0
    %1181 = vmatpush1.msra.mxu0 0.0
    %1182 = vmatprep.subr.mxu0 0.0
    %1183 = vmatpush1.msra.mxu0 0.0
    %1184 = vmatprep.subr.mxu0 0.0
    %1185 = vmatpush1.msra.mxu0 0.0
    %1186 = vmatprep.subr.mxu0 0.0
    %1187 = vmatpush1.msra.mxu0 0.0
    %1188 = vmatprep.subr.mxu0 0.0
    %1189 = vmatpush1.msra.mxu0 0.0
    %1190 = vmatprep.subr.mxu0 0.0
    %1191 = vmatpush1.msra.mxu0 0.0
    %1192 = vmatprep.subr.mxu0 0.0
    %1193 = vmatpush1.msra.mxu0 0.0
    %1194 = vmatprep.subr.mxu0 0.0
    %1195 = vmatpush1.msra.mxu0 0.0
    %1196 = vmatprep.subr.mxu0 0.0
    %1197 = vmatpush1.msra.mxu0 0.0
    %1198 = vmatprep.subr.mxu0 0.0
    %1199 = vmatpush1.msra.mxu0 0.0
    %1200 = vmatprep.subr.mxu0 0.0
    %1201 = vmatpush1.msra.mxu0 0.0
    %1202 = vmatprep.subr.mxu0 0.0
    %1203 = vmatpush1.msra.mxu0 0.0
    %1204 = vmatprep.subr.mxu0 0.0
    %1205 = vmatpush1.msra.mxu0 0.0
    %1206 = vmatprep.subr.mxu0 0.0
    %1207 = vmatpush1.msra.mxu0 0.0
    %1208 = vmatprep.subr.mxu0 0.0
    %1209 = vmatpush1.msra.mxu0 0.0
    %1210 = vmatprep.subr.mxu0 0.0
    %1211 = vmatpush1.msra.mxu0 0.0
    %1212 = vmatprep.subr.mxu0 0.0
    %1213 = vmatpush1.msra.mxu0 0.0
    %1214 = vmatprep.subr.mxu0 0.0
    %1215 = vmatpush1.msra.mxu0 0.0
    %1216 = vmatprep.subr.mxu0 0.0
    %1217 = vmatpush1.msra.mxu0 0.0
    %1218 = vmatprep.subr.mxu0 0.0
    %1219 = vmatpush1.msra.mxu0 0.0
    %1220 = vmatprep.subr.mxu0 0.0
    %1221 = vmatpush1.msra.mxu0 0.0
    %1222 = vmatprep.mubr.f32.mxu0 0.0
    %1223 = vmatmul.mubr.f32.gmra.mrb[0].mxu0 %v1156
    %v1224 = vpop.f32.mrb[0].mxu0
    %v1225 = vadd.f32 %v62, %v1224
    %v1226 = vpop.f32.mrb[0].mxu0
    %1227 = vdwg.mxu0
    %v1228 = vxor.u32 %v1225, 2147483648
    %v1229 = vmul.f32 %v1228, 1.442695
    %v1230 = vpow.pop %v1229
    %v1231 = vadd.f32 %v1230, 1.0
    %v1232 = vrcp.pop %v1231
    %v1233 = vmul.f32 1.0, %v1232
    %v1234 = vtanh.pop %v1225
    %v1235 = vmul.f32 %v1233, %v1031
    %1237 = vrot.lane.b32.xlu0 %v1234, 32
    %v1238 = vpop.permute.xlu0 %1237
    %v1240 = vmul.f32 %v1233, %v1238
    %1242 = vrot.lane.b32.xlu0 %v1240, 32
    %v1243 = vpop.permute.xlu0 %1242
    %v1245 = vadd.f32 %v1235, %v1243
    %v1246 = vtanh.pop %v1245
    %1248 = vrot.lane.b32.xlu0 %v1246, 32
    %v1249 = vpop.permute.xlu0 %1248
    %v1251 = vmul.f32 %v1233, %v1249
    %1253 = vrot.lane.b32.xlu0 %v1251, 64
    %v1254 = vpop.permute.xlu0 %1253
    %1256 = vrot.lane.b32.xlu0 %v1142, 96
    %v1257 = vpop.permute.xlu0 %1256
    %v1259 = vsel %vm178, %v1254, %v1257
    %v1261 = vsel %vm186, %v1259, 0
    %1263 = vmatprep.subr.mxu0 0.0
    %1264 = vmatpush1.msra.mxu0 %v35
    %1265 = vmatprep.subr.mxu0 0.0
    %1266 = vmatpush1.msra.mxu0 %v36
    %1267 = vmatprep.subr.mxu0 0.0
    %1268 = vmatpush1.msra.mxu0 %v37
    %1269 = vmatprep.subr.mxu0 0.0
    %1270 = vmatpush1.msra.mxu0 %v38
    %1271 = vmatprep.subr.mxu0 0.0
    %1272 = vmatpush1.msra.mxu0 %v39
    %1273 = vmatprep.subr.mxu0 0.0
    %1274 = vmatpush1.msra.mxu0 %v40
    %1275 = vmatprep.subr.mxu0 0.0
    %1276 = vmatpush1.msra.mxu0 %v41
    %1277 = vmatprep.subr.mxu0 0.0
    %1278 = vmatpush1.msra.mxu0 %v42
    %1279 = vmatprep.subr.mxu0 0.0
    %1280 = vmatpush1.msra.mxu0 0.0
    %1281 = vmatprep.subr.mxu0 0.0
    %1282 = vmatpush1.msra.mxu0 0.0
    %1283 = vmatprep.subr.mxu0 0.0
    %1284 = vmatpush1.msra.mxu0 0.0
    %1285 = vmatprep.subr.mxu0 0.0
    %1286 = vmatpush1.msra.mxu0 0.0
    %1287 = vmatprep.subr.mxu0 0.0
    %1288 = vmatpush1.msra.mxu0 0.0
    %1289 = vmatprep.subr.mxu0 0.0
    %1290 = vmatpush1.msra.mxu0 0.0
    %1291 = vmatprep.subr.mxu0 0.0
    %1292 = vmatpush1.msra.mxu0 0.0
    %1293 = vmatprep.subr.mxu0 0.0
    %1294 = vmatpush1.msra.mxu0 0.0
    %1295 = vmatprep.subr.mxu0 0.0
    %1296 = vmatpush1.msra.mxu0 0.0
    %1297 = vmatprep.subr.mxu0 0.0
    %1298 = vmatpush1.msra.mxu0 0.0
    %1299 = vmatprep.subr.mxu0 0.0
    %1300 = vmatpush1.msra.mxu0 0.0
    %1301 = vmatprep.subr.mxu0 0.0
    %1302 = vmatpush1.msra.mxu0 0.0
    %1303 = vmatprep.subr.mxu0 0.0
    %1304 = vmatpush1.msra.mxu0 0.0
    %1305 = vmatprep.subr.mxu0 0.0
    %1306 = vmatpush1.msra.mxu0 0.0
    %1307 = vmatprep.subr.mxu0 0.0
    %1308 = vmatpush1.msra.mxu0 0.0
    %1309 = vmatprep.subr.mxu0 0.0
    %1310 = vmatpush1.msra.mxu0 0.0
    %1311 = vmatprep.subr.mxu0 0.0
    %1312 = vmatpush1.msra.mxu0 0.0
    %1313 = vmatprep.subr.mxu0 0.0
    %1314 = vmatpush1.msra.mxu0 0.0
    %1315 = vmatprep.subr.mxu0 0.0
    %1316 = vmatpush1.msra.mxu0 0.0
    %1317 = vmatprep.subr.mxu0 0.0
    %1318 = vmatpush1.msra.mxu0 0.0
    %1319 = vmatprep.subr.mxu0 0.0
    %1320 = vmatpush1.msra.mxu0 0.0
    %1321 = vmatprep.subr.mxu0 0.0
    %1322 = vmatpush1.msra.mxu0 0.0
    %1323 = vmatprep.subr.mxu0 0.0
    %1324 = vmatpush1.msra.mxu0 0.0
    %1325 = vmatprep.subr.mxu0 0.0
    %1326 = vmatpush1.msra.mxu0 0.0
    %1327 = vmatprep.mubr.f32.mxu0 0.0
    %1328 = vmatmul.mubr.f32.gmra.mrb[0].mxu0 %v1261
    %v1329 = vpop.f32.mrb[0].mxu0
    %v1330 = vadd.f32 %v184, %v1329
    %v1331 = vpop.f32.mrb[0].mxu0
    %1332 = vdwg.mxu0
    %v1333 = vxor.u32 %v1330, 2147483648
    %v1334 = vmul.f32 %v1333, 1.442695
    %v1335 = vpow.pop %v1334
    %v1336 = vadd.f32 %v1335, 1.0
    %v1337 = vrcp.pop %v1336
    %v1338 = vmul.f32 1.0, %v1337
    %v1339 = vtanh.pop %v1330
    %v1340 = vmul.f32 %v1338, %v1136
    %1342 = vrot.lane.b32.xlu0 %v1339, 32
    %v1343 = vpop.permute.xlu0 %1342
    %v1345 = vmul.f32 %v1338, %v1343
    %1347 = vrot.lane.b32.xlu0 %v1345, 32
    %v1348 = vpop.permute.xlu0 %1347
    %v1350 = vadd.f32 %v1340, %v1348
    %v1351 = vtanh.pop %v1350
    %1353 = vrot.lane.b32.xlu0 %v1351, 32
    %v1354 = vpop.permute.xlu0 %1353
    %v1356 = vmul.f32 %v1338, %v1354
    %1358 = vrot.lane.b32.xlu0 %v1356, 64
    %v1359 = vpop.permute.xlu0 %1358
    %s1361 = scalar_lea.vmem [#allocation4], 40
    %1362 = vst.msk [vmem:[%s1361] sm:$0xff] %vm178, %v1359
    %s1363 = scalar_lea.vmem %s0, 48
    %v1364 = vld [vmem:[%s1363] sm:$0xff]
    %1365 = vrot.lane.b32.xlu0 %v1251, 70
    %v1366 = vpop.permute.xlu0 %1365
    %v1368 = vsel %vm56, %v1364, %v1366
    %v1370 = vsel %vm64, %v1368, 0
    %1372 = vmatprep.subr.mxu0 0.0
    %1373 = vmatpush1.msra.mxu0 %v30
    %1374 = vmatprep.subr.mxu0 0.0
    %1375 = vmatpush1.msra.mxu0 %v31
    %1376 = vmatprep.subr.mxu0 0.0
    %1377 = vmatpush1.msra.mxu0 %v32
    %1378 = vmatprep.subr.mxu0 0.0
    %1379 = vmatpush1.msra.mxu0 %v33
    %1380 = vmatprep.subr.mxu0 0.0
    %1381 = vmatpush1.msra.mxu0 %v70
    %1382 = vmatprep.subr.mxu0 0.0
    %1383 = vmatpush1.msra.mxu0 0.0
    %1384 = vmatprep.subr.mxu0 0.0
    %1385 = vmatpush1.msra.mxu0 0.0
    %1386 = vmatprep.subr.mxu0 0.0
    %1387 = vmatpush1.msra.mxu0 0.0
    %1388 = vmatprep.subr.mxu0 0.0
    %1389 = vmatpush1.msra.mxu0 0.0
    %1390 = vmatprep.subr.mxu0 0.0
    %1391 = vmatpush1.msra.mxu0 0.0
    %1392 = vmatprep.subr.mxu0 0.0
    %1393 = vmatpush1.msra.mxu0 0.0
    %1394 = vmatprep.subr.mxu0 0.0
    %1395 = vmatpush1.msra.mxu0 0.0
    %1396 = vmatprep.subr.mxu0 0.0
    %1397 = vmatpush1.msra.mxu0 0.0
    %1398 = vmatprep.subr.mxu0 0.0
    %1399 = vmatpush1.msra.mxu0 0.0
    %1400 = vmatprep.subr.mxu0 0.0
    %1401 = vmatpush1.msra.mxu0 0.0
    %1402 = vmatprep.subr.mxu0 0.0
    %1403 = vmatpush1.msra.mxu0 0.0
    %1404 = vmatprep.subr.mxu0 0.0
    %1405 = vmatpush1.msra.mxu0 0.0
    %1406 = vmatprep.subr.mxu0 0.0
    %1407 = vmatpush1.msra.mxu0 0.0
    %1408 = vmatprep.subr.mxu0 0.0
    %1409 = vmatpush1.msra.mxu0 0.0
    %1410 = vmatprep.subr.mxu0 0.0
    %1411 = vmatpush1.msra.mxu0 0.0
    %1412 = vmatprep.subr.mxu0 0.0
    %1413 = vmatpush1.msra.mxu0 0.0
    %1414 = vmatprep.subr.mxu0 0.0
    %1415 = vmatpush1.msra.mxu0 0.0
    %1416 = vmatprep.subr.mxu0 0.0
    %1417 = vmatpush1.msra.mxu0 0.0
    %1418 = vmatprep.subr.mxu0 0.0
    %1419 = vmatpush1.msra.mxu0 0.0
    %1420 = vmatprep.subr.mxu0 0.0
    %1421 = vmatpush1.msra.mxu0 0.0
    %1422 = vmatprep.subr.mxu0 0.0
    %1423 = vmatpush1.msra.mxu0 0.0
    %1424 = vmatprep.subr.mxu0 0.0
    %1425 = vmatpush1.msra.mxu0 0.0
    %1426 = vmatprep.subr.mxu0 0.0
    %1427 = vmatpush1.msra.mxu0 0.0
    %1428 = vmatprep.subr.mxu0 0.0
    %1429 = vmatpush1.msra.mxu0 0.0
    %1430 = vmatprep.subr.mxu0 0.0
    %1431 = vmatpush1.msra.mxu0 0.0
    %1432 = vmatprep.subr.mxu0 0.0
    %1433 = vmatpush1.msra.mxu0 0.0
    %1434 = vmatprep.subr.mxu0 0.0
    %1435 = vmatpush1.msra.mxu0 0.0
    %1436 = vmatprep.mubr.f32.mxu0 0.0
    %1437 = vmatmul.mubr.f32.gmra.mrb[0].mxu0 %v1370
    %v1438 = vpop.f32.mrb[0].mxu0
    %v1439 = vadd.f32 %v62, %v1438
    %v1440 = vpop.f32.mrb[0].mxu0
    %1441 = vdwg.mxu0
    %v1442 = vxor.u32 %v1439, 2147483648
    %v1443 = vmul.f32 %v1442, 1.442695
    %v1444 = vpow.pop %v1443
    %v1445 = vadd.f32 %v1444, 1.0
    %v1446 = vrcp.pop %v1445
    %v1447 = vmul.f32 1.0, %v1446
    %v1448 = vtanh.pop %v1439
    %v1449 = vmul.f32 %v1447, %v1245
    %1451 = vrot.lane.b32.xlu0 %v1448, 32
    %v1452 = vpop.permute.xlu0 %1451
    %v1454 = vmul.f32 %v1447, %v1452
    %1456 = vrot.lane.b32.xlu0 %v1454, 32
    %v1457 = vpop.permute.xlu0 %1456
    %v1459 = vadd.f32 %v1449, %v1457
    %v1460 = vtanh.pop %v1459
    %1462 = vrot.lane.b32.xlu0 %v1460, 32
    %v1463 = vpop.permute.xlu0 %1462
    %v1465 = vmul.f32 %v1447, %v1463
    %1467 = vrot.lane.b32.xlu0 %v1465, 64
    %v1468 = vpop.permute.xlu0 %1467
    %1470 = vrot.lane.b32.xlu0 %v1356, 96
    %v1471 = vpop.permute.xlu0 %1470
    %v1473 = vsel %vm178, %v1468, %v1471
    %v1475 = vsel %vm186, %v1473, 0
    %1477 = vmatprep.subr.mxu0 0.0
    %1478 = vmatpush1.msra.mxu0 %v35
    %1479 = vmatprep.subr.mxu0 0.0
    %1480 = vmatpush1.msra.mxu0 %v36
    %1481 = vmatprep.subr.mxu0 0.0
    %1482 = vmatpush1.msra.mxu0 %v37
    %1483 = vmatprep.subr.mxu0 0.0
    %1484 = vmatpush1.msra.mxu0 %v38
    %1485 = vmatprep.subr.mxu0 0.0
    %1486 = vmatpush1.msra.mxu0 %v39
    %1487 = vmatprep.subr.mxu0 0.0
    %1488 = vmatpush1.msra.mxu0 %v40
    %1489 = vmatprep.subr.mxu0 0.0
    %1490 = vmatpush1.msra.mxu0 %v41
    %1491 = vmatprep.subr.mxu0 0.0
    %1492 = vmatpush1.msra.mxu0 %v42
    %1493 = vmatprep.subr.mxu0 0.0
    %1494 = vmatpush1.msra.mxu0 0.0
    %1495 = vmatprep.subr.mxu0 0.0
    %1496 = vmatpush1.msra.mxu0 0.0
    %1497 = vmatprep.subr.mxu0 0.0
    %1498 = vmatpush1.msra.mxu0 0.0
    %1499 = vmatprep.subr.mxu0 0.0
    %1500 = vmatpush1.msra.mxu0 0.0
    %1501 = vmatprep.subr.mxu0 0.0
    %1502 = vmatpush1.msra.mxu0 0.0
    %1503 = vmatprep.subr.mxu0 0.0
    %1504 = vmatpush1.msra.mxu0 0.0
    %1505 = vmatprep.subr.mxu0 0.0
    %1506 = vmatpush1.msra.mxu0 0.0
    %1507 = vmatprep.subr.mxu0 0.0
    %1508 = vmatpush1.msra.mxu0 0.0
    %1509 = vmatprep.subr.mxu0 0.0
    %1510 = vmatpush1.msra.mxu0 0.0
    %1511 = vmatprep.subr.mxu0 0.0
    %1512 = vmatpush1.msra.mxu0 0.0
    %1513 = vmatprep.subr.mxu0 0.0
    %1514 = vmatpush1.msra.mxu0 0.0
    %1515 = vmatprep.subr.mxu0 0.0
    %1516 = vmatpush1.msra.mxu0 0.0
    %1517 = vmatprep.subr.mxu0 0.0
    %1518 = vmatpush1.msra.mxu0 0.0
    %1519 = vmatprep.subr.mxu0 0.0
    %1520 = vmatpush1.msra.mxu0 0.0
    %1521 = vmatprep.subr.mxu0 0.0
    %1522 = vmatpush1.msra.mxu0 0.0
    %1523 = vmatprep.subr.mxu0 0.0
    %1524 = vmatpush1.msra.mxu0 0.0
    %1525 = vmatprep.subr.mxu0 0.0
    %1526 = vmatpush1.msra.mxu0 0.0
    %1527 = vmatprep.subr.mxu0 0.0
    %1528 = vmatpush1.msra.mxu0 0.0
    %1529 = vmatprep.subr.mxu0 0.0
    %1530 = vmatpush1.msra.mxu0 0.0
    %1531 = vmatprep.subr.mxu0 0.0
    %1532 = vmatpush1.msra.mxu0 0.0
    %1533 = vmatprep.subr.mxu0 0.0
    %1534 = vmatpush1.msra.mxu0 0.0
    %1535 = vmatprep.subr.mxu0 0.0
    %1536 = vmatpush1.msra.mxu0 0.0
    %1537 = vmatprep.subr.mxu0 0.0
    %1538 = vmatpush1.msra.mxu0 0.0
    %1539 = vmatprep.subr.mxu0 0.0
    %1540 = vmatpush1.msra.mxu0 0.0
    %1541 = vmatprep.mubr.f32.mxu0 0.0
    %1542 = vmatmul.mubr.f32.gmra.mrb[0].mxu0 %v1475
    %v1543 = vpop.f32.mrb[0].mxu0
    %v1544 = vadd.f32 %v184, %v1543
    %v1545 = vpop.f32.mrb[0].mxu0
    %1546 = vdwg.mxu0
    %v1547 = vxor.u32 %v1544, 2147483648
    %v1548 = vmul.f32 %v1547, 1.442695
    %v1549 = vpow.pop %v1548
    %v1550 = vadd.f32 %v1549, 1.0
    %v1551 = vrcp.pop %v1550
    %v1552 = vmul.f32 1.0, %v1551
    %v1553 = vtanh.pop %v1544
    %v1554 = vmul.f32 %v1552, %v1350
    %1556 = vrot.lane.b32.xlu0 %v1553, 32
    %v1557 = vpop.permute.xlu0 %1556
    %v1559 = vmul.f32 %v1552, %v1557
    %1561 = vrot.lane.b32.xlu0 %v1559, 32
    %v1562 = vpop.permute.xlu0 %1561
    %v1564 = vadd.f32 %v1554, %v1562
    %v1565 = vtanh.pop %v1564
    %1567 = vrot.lane.b32.xlu0 %v1565, 32
    %v1568 = vpop.permute.xlu0 %1567
    %v1570 = vmul.f32 %v1552, %v1568
    %1572 = vrot.lane.b32.xlu0 %v1570, 64
    %v1573 = vpop.permute.xlu0 %1572
    %s1575 = scalar_lea.vmem [#allocation4], 48
    %1576 = vst.msk [vmem:[%s1575] sm:$0xff] %vm178, %v1573
    %s1577 = scalar_lea.vmem %s0, 56
    %v1578 = vld [vmem:[%s1577] sm:$0xff]
    %1579 = vrot.lane.b32.xlu0 %v1465, 70
    %v1580 = vpop.permute.xlu0 %1579
    %v1582 = vsel %vm56, %v1578, %v1580
    %v1584 = vsel %vm64, %v1582, 0
    %1586 = vmatprep.subr.mxu0 0.0
    %1587 = vmatpush1.msra.mxu0 %v30
    %1588 = vmatprep.subr.mxu0 0.0
    %1589 = vmatpush1.msra.mxu0 %v31
    %1590 = vmatprep.subr.mxu0 0.0
    %1591 = vmatpush1.msra.mxu0 %v32
    %1592 = vmatprep.subr.mxu0 0.0
    %1593 = vmatpush1.msra.mxu0 %v33
    %1594 = vmatprep.subr.mxu0 0.0
    %1595 = vmatpush1.msra.mxu0 %v70
    %1596 = vmatprep.subr.mxu0 0.0
    %1597 = vmatpush1.msra.mxu0 0.0
    %1598 = vmatprep.subr.mxu0 0.0
    %1599 = vmatpush1.msra.mxu0 0.0
    %1600 = vmatprep.subr.mxu0 0.0
    %1601 = vmatpush1.msra.mxu0 0.0
    %1602 = vmatprep.subr.mxu0 0.0
    %1603 = vmatpush1.msra.mxu0 0.0
    %1604 = vmatprep.subr.mxu0 0.0
    %1605 = vmatpush1.msra.mxu0 0.0
    %1606 = vmatprep.subr.mxu0 0.0
    %1607 = vmatpush1.msra.mxu0 0.0
    %1608 = vmatprep.subr.mxu0 0.0
    %1609 = vmatpush1.msra.mxu0 0.0
    %1610 = vmatprep.subr.mxu0 0.0
    %1611 = vmatpush1.msra.mxu0 0.0
    %1612 = vmatprep.subr.mxu0 0.0
    %1613 = vmatpush1.msra.mxu0 0.0
    %1614 = vmatprep.subr.mxu0 0.0
    %1615 = vmatpush1.msra.mxu0 0.0
    %1616 = vmatprep.subr.mxu0 0.0
    %1617 = vmatpush1.msra.mxu0 0.0
    %1618 = vmatprep.subr.mxu0 0.0
    %1619 = vmatpush1.msra.mxu0 0.0
    %1620 = vmatprep.subr.mxu0 0.0
    %1621 = vmatpush1.msra.mxu0 0.0
    %1622 = vmatprep.subr.mxu0 0.0
    %1623 = vmatpush1.msra.mxu0 0.0
    %1624 = vmatprep.subr.mxu0 0.0
    %1625 = vmatpush1.msra.mxu0 0.0
    %1626 = vmatprep.subr.mxu0 0.0
    %1627 = vmatpush1.msra.mxu0 0.0
    %1628 = vmatprep.subr.mxu0 0.0
    %1629 = vmatpush1.msra.mxu0 0.0
    %1630 = vmatprep.subr.mxu0 0.0
    %1631 = vmatpush1.msra.mxu0 0.0
    %1632 = vmatprep.subr.mxu0 0.0
    %1633 = vmatpush1.msra.mxu0 0.0
    %1634 = vmatprep.subr.mxu0 0.0
    %1635 = vmatpush1.msra.mxu0 0.0
    %1636 = vmatprep.subr.mxu0 0.0
    %1637 = vmatpush1.msra.mxu0 0.0
    %1638 = vmatprep.subr.mxu0 0.0
    %1639 = vmatpush1.msra.mxu0 0.0
    %1640 = vmatprep.subr.mxu0 0.0
    %1641 = vmatpush1.msra.mxu0 0.0
    %1642 = vmatprep.subr.mxu0 0.0
    %1643 = vmatpush1.msra.mxu0 0.0
    %1644 = vmatprep.subr.mxu0 0.0
    %1645 = vmatpush1.msra.mxu0 0.0
    %1646 = vmatprep.subr.mxu0 0.0
    %1647 = vmatpush1.msra.mxu0 0.0
    %1648 = vmatprep.subr.mxu0 0.0
    %1649 = vmatpush1.msra.mxu0 0.0
    %1650 = vmatprep.mubr.f32.mxu0 0.0
    %1651 = vmatmul.mubr.f32.gmra.mrb[0].mxu0 %v1584
    %v1652 = vpop.f32.mrb[0].mxu0
    %v1653 = vadd.f32 %v62, %v1652
    %v1654 = vpop.f32.mrb[0].mxu0
    %1655 = vdwg.mxu0
    %v1656 = vxor.u32 %v1653, 2147483648
    %v1657 = vmul.f32 %v1656, 1.442695
    %v1658 = vpow.pop %v1657
    %v1659 = vadd.f32 %v1658, 1.0
    %v1660 = vrcp.pop %v1659
    %v1661 = vmul.f32 1.0, %v1660
    %v1662 = vtanh.pop %v1653
    %v1663 = vmul.f32 %v1661, %v1459
    %1665 = vrot.lane.b32.xlu0 %v1662, 32
    %v1666 = vpop.permute.xlu0 %1665
    %v1668 = vmul.f32 %v1661, %v1666
    %1670 = vrot.lane.b32.xlu0 %v1668, 32
    %v1671 = vpop.permute.xlu0 %1670
    %v1673 = vadd.f32 %v1663, %v1671
    %v1674 = vtanh.pop %v1673
    %1676 = vrot.lane.b32.xlu0 %v1674, 32
    %v1677 = vpop.permute.xlu0 %1676
    %v1679 = vmul.f32 %v1661, %v1677
    %1681 = vrot.lane.b32.xlu0 %v1679, 64
    %v1682 = vpop.permute.xlu0 %1681
    %1684 = vrot.lane.b32.xlu0 %v1570, 96
    %v1685 = vpop.permute.xlu0 %1684
    %v1687 = vsel %vm178, %v1682, %v1685
    %v1689 = vsel %vm186, %v1687, 0
    %1691 = vmatprep.subr.mxu0 0.0
    %1692 = vmatpush1.msra.mxu0 %v35
    %1693 = vmatprep.subr.mxu0 0.0
    %1694 = vmatpush1.msra.mxu0 %v36
    %1695 = vmatprep.subr.mxu0 0.0
    %1696 = vmatpush1.msra.mxu0 %v37
    %1697 = vmatprep.subr.mxu0 0.0
    %1698 = vmatpush1.msra.mxu0 %v38
    %1699 = vmatprep.subr.mxu0 0.0
    %1700 = vmatpush1.msra.mxu0 %v39
    %1701 = vmatprep.subr.mxu0 0.0
    %1702 = vmatpush1.msra.mxu0 %v40
    %1703 = vmatprep.subr.mxu0 0.0
    %1704 = vmatpush1.msra.mxu0 %v41
    %1705 = vmatprep.subr.mxu0 0.0
    %1706 = vmatpush1.msra.mxu0 %v42
    %1707 = vmatprep.subr.mxu0 0.0
    %1708 = vmatpush1.msra.mxu0 0.0
    %1709 = vmatprep.subr.mxu0 0.0
    %1710 = vmatpush1.msra.mxu0 0.0
    %1711 = vmatprep.subr.mxu0 0.0
    %1712 = vmatpush1.msra.mxu0 0.0
    %1713 = vmatprep.subr.mxu0 0.0
    %1714 = vmatpush1.msra.mxu0 0.0
    %1715 = vmatprep.subr.mxu0 0.0
    %1716 = vmatpush1.msra.mxu0 0.0
    %1717 = vmatprep.subr.mxu0 0.0
    %1718 = vmatpush1.msra.mxu0 0.0
    %1719 = vmatprep.subr.mxu0 0.0
    %1720 = vmatpush1.msra.mxu0 0.0
    %1721 = vmatprep.subr.mxu0 0.0
    %1722 = vmatpush1.msra.mxu0 0.0
    %1723 = vmatprep.subr.mxu0 0.0
    %1724 = vmatpush1.msra.mxu0 0.0
    %1725 = vmatprep.subr.mxu0 0.0
    %1726 = vmatpush1.msra.mxu0 0.0
    %1727 = vmatprep.subr.mxu0 0.0
    %1728 = vmatpush1.msra.mxu0 0.0
    %1729 = vmatprep.subr.mxu0 0.0
    %1730 = vmatpush1.msra.mxu0 0.0
    %1731 = vmatprep.subr.mxu0 0.0
    %1732 = vmatpush1.msra.mxu0 0.0
    %1733 = vmatprep.subr.mxu0 0.0
    %1734 = vmatpush1.msra.mxu0 0.0
    %1735 = vmatprep.subr.mxu0 0.0
    %1736 = vmatpush1.msra.mxu0 0.0
    %1737 = vmatprep.subr.mxu0 0.0
    %1738 = vmatpush1.msra.mxu0 0.0
    %1739 = vmatprep.subr.mxu0 0.0
    %1740 = vmatpush1.msra.mxu0 0.0
    %1741 = vmatprep.subr.mxu0 0.0
    %1742 = vmatpush1.msra.mxu0 0.0
    %1743 = vmatprep.subr.mxu0 0.0
    %1744 = vmatpush1.msra.mxu0 0.0
    %1745 = vmatprep.subr.mxu0 0.0
    %1746 = vmatpush1.msra.mxu0 0.0
    %1747 = vmatprep.subr.mxu0 0.0
    %1748 = vmatpush1.msra.mxu0 0.0
    %1749 = vmatprep.subr.mxu0 0.0
    %1750 = vmatpush1.msra.mxu0 0.0
    %1751 = vmatprep.subr.mxu0 0.0
    %1752 = vmatpush1.msra.mxu0 0.0
    %1753 = vmatprep.subr.mxu0 0.0
    %1754 = vmatpush1.msra.mxu0 0.0
    %1755 = vmatprep.mubr.f32.mxu0 0.0
    %1756 = vmatmul.mubr.f32.gmra.mrb[0].mxu0 %v1689
    %v1757 = vpop.f32.mrb[0].mxu0
    %v1758 = vadd.f32 %v184, %v1757
    %v1759 = vpop.f32.mrb[0].mxu0
    %1760 = vdwg.mxu0
    %v1761 = vxor.u32 %v1758, 2147483648
    %v1762 = vmul.f32 %v1761, 1.442695
    %v1763 = vpow.pop %v1762
    %v1764 = vadd.f32 %v1763, 1.0
    %v1765 = vrcp.pop %v1764
    %v1766 = vmul.f32 1.0, %v1765
    %v1767 = vtanh.pop %v1758
    %v1768 = vmul.f32 %v1766, %v1564
    %1770 = vrot.lane.b32.xlu0 %v1767, 32
    %v1771 = vpop.permute.xlu0 %1770
    %v1773 = vmul.f32 %v1766, %v1771
    %1775 = vrot.lane.b32.xlu0 %v1773, 32
    %v1776 = vpop.permute.xlu0 %1775
    %v1778 = vadd.f32 %v1768, %v1776
    %v1779 = vtanh.pop %v1778
    %1781 = vrot.lane.b32.xlu0 %v1779, 32
    %v1782 = vpop.permute.xlu0 %1781
    %v1784 = vmul.f32 %v1766, %v1782
    %1786 = vrot.lane.b32.xlu0 %v1784, 64
    %v1787 = vpop.permute.xlu0 %1786
    %s1789 = scalar_lea.vmem [#allocation4], 56
    %1790 = vst.msk [vmem:[%s1789] sm:$0xff] %vm178, %v1787
    %1791 = vst.msk [vmem:[#allocation2] sm:$0xff] %vm178, %v1682
    %1793 = vrot.lane.b32.xlu0 %v1673, 96
    %v1794 = vpop.permute.xlu0 %1793
    %1796 = vst.msk [vmem:[#allocation3] sm:$0xff] %vm178, %v1794
    %1797 = vst.msk [vmem:[%s46] sm:$0xff] %vm178, %v1787
    %1799 = vrot.lane.b32.xlu0 %v1778, 96
    %v1800 = vpop.permute.xlu0 %1799
    %1802 = vst.msk [vmem:[%s49] sm:$0xff] %vm178, %v1800
    // Predicated region
    $region26: #{tpu_custom_call.1} parent=1 // pred_check
      _
    $region27: #{tpu_custom_call.1} parent=1 // pred_check_branch
      %1804 = sbr.rel (0) target = $region29
    $region28: #{tpu_custom_call.1} parent=1 // pred_region
      %s1806 = ssub.s32 1024, 1024
      %1807 = vsyncadd [#allocation5], %s1806
      %s1808 = sshll.u32 [#allocation4], 4
      %s1809 = int_to_ptr.vmem [resolvable:$true] %s1808
      %1814 = dma.vmem_to_hbm [thread:$0]  %s1809, 1024, %s5, [#allocation5], 128, 128, 8
    $region29: #{tpu_custom_call.1} parent=1 // pred_fallthru
      _
    // Predicated region
    $region30: #{tpu_custom_call.1} parent=1 // pred_check
      _
    $region31: #{tpu_custom_call.1} parent=1 // pred_check_branch
      %1816 = sbr.rel (0) target = $region33
    $region32: #{tpu_custom_call.1} parent=1 // pred_region
      %1817 = dma.done [#allocation5], 1024
    $region33: #{tpu_custom_call.1} parent=1 // pred_fallthru
      _
    %1818 = vsyncpa [#allocation5], 1

</llo_original>
